<compile_context>
chip_gen: v7x
topology: tpu7x:2x2x1
jax: 0.10.0
libtpu: 0.0.40
codegen_flags: <defaults>
</compile_context>

<pallas_src>
import jax
import jax.numpy as jnp
from jax.experimental import pallas as pl
from jax.experimental.pallas import tpu as pltpu

# ----------------------------- configuration -------------------------------
B = 2            # batch
N = 16           # num_node
C_IN = 4         # input_size
HID = 32         # hidden_size
N_SUPPORTS = 2   # n_supports
K_HOP = 2        # k_hop
K_MATS = 1 + N_SUPPORTS * K_HOP   # diffusion matrices (identity + hops) = 5
C_CAT = C_IN + HID                # channels of cat([inputs, states], -1) = 36
F_DIM = K_MATS * C_CAT            # stacked contraction dim = 180

DTYPE = jnp.float32


# ------------------------------ Pallas kernel ------------------------------
def dcgru_kernel(x_ref, h_ref, sup_ref,
                 w_ru_ref, b_ru_ref, w_c_ref, b_c_ref,
                 out_ref):
    """Whole batch in one shot; everything is tiny and resident in VMEM."""
    h_flat = h_ref[...].reshape(B * N, HID)                     # (B*N, H)

    # ---- phase 1: diffuse [x | h] chains (one chain per (batch, support)) ----
    f_ru_rows = []
    for b in range(B):
        xh = jnp.concatenate([x_ref[b], h_ref[b]], axis=-1)     # (N, C_CAT)
        blocks = [xh]
        for s in range(N_SUPPORTS):
            A = sup_ref[b, s]                                   # (N, N)
            z = xh
            for _ in range(K_HOP):
                z = jnp.dot(A, z, preferred_element_type=jnp.float32)
                blocks.append(z)
        # stacked feature slab for this batch element: (N, K_MATS*C_CAT)
        f_ru_rows.append(jnp.concatenate(blocks, axis=-1))
    f_ru = jnp.concatenate(f_ru_rows, axis=0)                   # (B*N, F_DIM)

    # ---- fused r/u gate: single K=F_DIM matmul, 2H-wide output ----
    ru = jax.nn.sigmoid(
        jnp.dot(f_ru, w_ru_ref[...], preferred_element_type=jnp.float32)
        + b_ru_ref[...])                                        # (B*N, 2H)
    r = ru[:, :HID]
    u = ru[:, HID:]
    rh = r * h_flat                                             # (B*N, H)

    # ---- phase 2: diffuse [x | r*h] chains for the candidate gate ----
    f_c_rows = []
    for b in range(B):
        xrh = jnp.concatenate([x_ref[b], rh[b * N:(b + 1) * N, :]], axis=-1)
        blocks = [xrh]
        for s in range(N_SUPPORTS):
            A = sup_ref[b, s]
            z = xrh
            for _ in range(K_HOP):
                z = jnp.dot(A, z, preferred_element_type=jnp.float32)
                blocks.append(z)
        f_c_rows.append(jnp.concatenate(blocks, axis=-1))
    f_c = jnp.concatenate(f_c_rows, axis=0)                     # (B*N, F_DIM)

    # ---- candidate gate: single K=F_DIM matmul ----
    c = jnp.tanh(
        jnp.dot(f_c, w_c_ref[...], preferred_element_type=jnp.float32)
        + b_c_ref[...])                                         # (B*N, H)

    # ---- GRU blend ----
    out_ref[...] = u * h_flat + (1.0 - u) * c                   # (B*N, H)


def dcgru_cell_pallas(x, h, supports, W_ru, b_ru, W_c, b_c):
    """x:(B,N,C_IN) h:(B,N,H) supports:(B,S,N,N) W_ru:(F_DIM,2H) W_c:(F_DIM,H)."""
    vmem = pl.BlockSpec(memory_space=pltpu.MemorySpace.VMEM)
    out_flat = pl.pallas_call(
        dcgru_kernel,
        out_shape=jax.ShapeDtypeStruct((B * N, HID), DTYPE),
        in_specs=[vmem] * 7,
        out_specs=vmem,
    )(x, h, supports,
      W_ru, b_ru.reshape(1, -1), W_c, b_c.reshape(1, -1))
    out = out_flat.reshape(B, N, HID)
    # DCGRUCell.forward returns (outputs, new_state) which alias the same tensor
    return out, out


# --------------------------- plain-JAX reference ---------------------------
def _gconv_ref(xh, supports, W, b):
    feats = [xh]
    for s in range(N_SUPPORTS):
        z = xh
        for _ in range(K_HOP):
            z = jnp.einsum('bij,bjc->bic', supports[:, s], z)
            feats.append(z)
    F = jnp.concatenate(feats, -1)
    return jnp.einsum('bnf,fo->bno', F, W) + b


def dcgru_cell_ref(x, h, supports, W_ru, b_ru, W_c, b_c):
    ru = jax.nn.sigmoid(_gconv_ref(jnp.concatenate([x, h], -1), supports, W_ru, b_ru))
    r, u = ru[..., :HID], ru[..., HID:]
    c = jnp.tanh(_gconv_ref(jnp.concatenate([x, r * h], -1), supports, W_c, b_c))
    return u * h + (1.0 - u) * c


# --------------------------------- main -------------------------------------
if __name__ == "__main__":
    key = jax.random.PRNGKey(0)
    k_x, k_h, k_sup, k_wru, k_bru, k_wc, k_bc = jax.random.split(key, 7)

    # inputs
    x = jax.random.normal(k_x, (B, N, C_IN), DTYPE)
    h = jax.random.normal(k_h, (B, N, HID), DTYPE)
    # per-batch dense supports, row-normalized (random-walk style)
    raw = jax.random.uniform(k_sup, (B, N_SUPPORTS, N, N), DTYPE)
    supports = raw / jnp.sum(raw, axis=-1, keepdims=True)

    # deterministic parameters (PyTorch-style flat weights of the two graph convs)
    W_ru = 0.1 * jax.random.normal(k_wru, (F_DIM, 2 * HID), DTYPE)
    b_ru = 0.1 * jax.random.normal(k_bru, (2 * HID,), DTYPE)
    W_c = 0.1 * jax.random.normal(k_wc, (F_DIM, HID), DTYPE)
    b_c = 0.1 * jax.random.normal(k_bc, (HID,), DTYPE)

    outputs, new_state = dcgru_cell_pallas(x, h, supports, W_ru, b_ru, W_c, b_c)
    outputs = jax.block_until_ready(outputs)

    ref = dcgru_cell_ref(x, h, supports, W_ru, b_ru, W_c, b_c)
    assert outputs.shape == (B, N, HID)
    assert jnp.allclose(outputs, ref, atol=1e-4, rtol=1e-4), "mismatch vs reference"

    print("KERNEL_OK")
</pallas_src>

<mosaic_0001>
module attributes {stable_mosaic.version = 11 : i64} {
  func.func @dcgru_kernel(%arg0: memref<2x16x4xf32, #tpu.memory_space<vmem>>, %arg1: memref<2x16x32xf32, #tpu.memory_space<vmem>>, %arg2: memref<2x2x16x16xf32, #tpu.memory_space<vmem>>, %arg3: memref<180x64xf32, #tpu.memory_space<vmem>>, %arg4: memref<1x64xf32, #tpu.memory_space<vmem>>, %arg5: memref<180x32xf32, #tpu.memory_space<vmem>>, %arg6: memref<1x32xf32, #tpu.memory_space<vmem>>, %arg7: memref<32x32xf32, #tpu.memory_space<vmem>>) attributes {dimension_semantics = [], scalar_prefetch = 0 : i64, scratch_operands = 0 : i64, tpu.core_type = #tpu.core_type<tc>} {
    %c0 = arith.constant 0 : index
    %c0_0 = arith.constant 0 : index
    %c0_1 = arith.constant 0 : index
    %0 = vector.load %arg1[%c0, %c0_0, %c0_1] : memref<2x16x32xf32, #tpu.memory_space<vmem>>, vector<2x16x32xf32>
    %1 = vector.shape_cast %0 : vector<2x16x32xf32> to vector<32x32xf32>
    %c0_2 = arith.constant 0 : index
    %c0_3 = arith.constant 0 : index
    %c0_4 = arith.constant 0 : index
    %2 = vector.load %arg0[%c0_2, %c0_3, %c0_4] : memref<2x16x4xf32, #tpu.memory_space<vmem>>, vector<1x16x4xf32>
    %3 = vector.shape_cast %2 : vector<1x16x4xf32> to vector<16x4xf32>
    %c0_5 = arith.constant 0 : index
    %c0_6 = arith.constant 0 : index
    %c0_7 = arith.constant 0 : index
    %4 = vector.load %arg1[%c0_5, %c0_6, %c0_7] : memref<2x16x32xf32, #tpu.memory_space<vmem>>, vector<1x16x32xf32>
    %5 = vector.shape_cast %4 : vector<1x16x32xf32> to vector<16x32xf32>
    %6 = tpu.concatenate %3, %5 in 1 : vector<16x4xf32>, vector<16x32xf32> -> vector<16x36xf32>
    %c0_8 = arith.constant 0 : index
    %c0_9 = arith.constant 0 : index
    %c0_10 = arith.constant 0 : index
    %c0_11 = arith.constant 0 : index
    %7 = vector.load %arg2[%c0_8, %c0_9, %c0_10, %c0_11] : memref<2x2x16x16xf32, #tpu.memory_space<vmem>>, vector<1x1x16x16xf32>
    %8 = vector.shape_cast %7 : vector<1x1x16x16xf32> to vector<16x16xf32>
    %cst = arith.constant dense<0.000000e+00> : vector<16x36xf32>
    %9 = tpu.matmul %8, %6, %cst {dimension_numbers = #tpu.dot_dimension_numbers<[1], [0], [0], [1], [0, 0, 1, 1], [], []>} : vector<16x16xf32>, vector<16x36xf32>, vector<16x36xf32> -> vector<16x36xf32>
    %cst_12 = arith.constant dense<0.000000e+00> : vector<16x36xf32>
    %10 = tpu.matmul %8, %9, %cst_12 {dimension_numbers = #tpu.dot_dimension_numbers<[1], [0], [0], [1], [0, 0, 1, 1], [], []>} : vector<16x16xf32>, vector<16x36xf32>, vector<16x36xf32> -> vector<16x36xf32>
    %c0_13 = arith.constant 0 : index
    %c1 = arith.constant 1 : index
    %c0_14 = arith.constant 0 : index
    %c0_15 = arith.constant 0 : index
    %11 = vector.load %arg2[%c0_13, %c1, %c0_14, %c0_15] : memref<2x2x16x16xf32, #tpu.memory_space<vmem>>, vector<1x1x16x16xf32>
    %12 = vector.shape_cast %11 : vector<1x1x16x16xf32> to vector<16x16xf32>
    %cst_16 = arith.constant dense<0.000000e+00> : vector<16x36xf32>
    %13 = tpu.matmul %12, %6, %cst_16 {dimension_numbers = #tpu.dot_dimension_numbers<[1], [0], [0], [1], [0, 0, 1, 1], [], []>} : vector<16x16xf32>, vector<16x36xf32>, vector<16x36xf32> -> vector<16x36xf32>
    %cst_17 = arith.constant dense<0.000000e+00> : vector<16x36xf32>
    %14 = tpu.matmul %12, %13, %cst_17 {dimension_numbers = #tpu.dot_dimension_numbers<[1], [0], [0], [1], [0, 0, 1, 1], [], []>} : vector<16x16xf32>, vector<16x36xf32>, vector<16x36xf32> -> vector<16x36xf32>
    %15 = tpu.concatenate %6, %9, %10, %13, %14 in 1 : vector<16x36xf32>, vector<16x36xf32>, vector<16x36xf32>, vector<16x36xf32>, vector<16x36xf32> -> vector<16x180xf32>
    %c1_18 = arith.constant 1 : index
    %c0_19 = arith.constant 0 : index
    %c0_20 = arith.constant 0 : index
    %16 = vector.load %arg0[%c1_18, %c0_19, %c0_20] : memref<2x16x4xf32, #tpu.memory_space<vmem>>, vector<1x16x4xf32>
    %17 = vector.shape_cast %16 : vector<1x16x4xf32> to vector<16x4xf32>
    %c1_21 = arith.constant 1 : index
    %c0_22 = arith.constant 0 : index
    %c0_23 = arith.constant 0 : index
    %18 = vector.load %arg1[%c1_21, %c0_22, %c0_23] : memref<2x16x32xf32, #tpu.memory_space<vmem>>, vector<1x16x32xf32>
    %19 = vector.shape_cast %18 : vector<1x16x32xf32> to vector<16x32xf32>
    %20 = tpu.concatenate %17, %19 in 1 : vector<16x4xf32>, vector<16x32xf32> -> vector<16x36xf32>
    %c1_24 = arith.constant 1 : index
    %c0_25 = arith.constant 0 : index
    %c0_26 = arith.constant 0 : index
    %c0_27 = arith.constant 0 : index
    %21 = vector.load %arg2[%c1_24, %c0_25, %c0_26, %c0_27] : memref<2x2x16x16xf32, #tpu.memory_space<vmem>>, vector<1x1x16x16xf32>
    %22 = vector.shape_cast %21 : vector<1x1x16x16xf32> to vector<16x16xf32>
    %cst_28 = arith.constant dense<0.000000e+00> : vector<16x36xf32>
    %23 = tpu.matmul %22, %20, %cst_28 {dimension_numbers = #tpu.dot_dimension_numbers<[1], [0], [0], [1], [0, 0, 1, 1], [], []>} : vector<16x16xf32>, vector<16x36xf32>, vector<16x36xf32> -> vector<16x36xf32>
    %cst_29 = arith.constant dense<0.000000e+00> : vector<16x36xf32>
    %24 = tpu.matmul %22, %23, %cst_29 {dimension_numbers = #tpu.dot_dimension_numbers<[1], [0], [0], [1], [0, 0, 1, 1], [], []>} : vector<16x16xf32>, vector<16x36xf32>, vector<16x36xf32> -> vector<16x36xf32>
    %c1_30 = arith.constant 1 : index
    %c1_31 = arith.constant 1 : index
    %c0_32 = arith.constant 0 : index
    %c0_33 = arith.constant 0 : index
    %25 = vector.load %arg2[%c1_30, %c1_31, %c0_32, %c0_33] : memref<2x2x16x16xf32, #tpu.memory_space<vmem>>, vector<1x1x16x16xf32>
    %26 = vector.shape_cast %25 : vector<1x1x16x16xf32> to vector<16x16xf32>
    %cst_34 = arith.constant dense<0.000000e+00> : vector<16x36xf32>
    %27 = tpu.matmul %26, %20, %cst_34 {dimension_numbers = #tpu.dot_dimension_numbers<[1], [0], [0], [1], [0, 0, 1, 1], [], []>} : vector<16x16xf32>, vector<16x36xf32>, vector<16x36xf32> -> vector<16x36xf32>
    %cst_35 = arith.constant dense<0.000000e+00> : vector<16x36xf32>
    %28 = tpu.matmul %26, %27, %cst_35 {dimension_numbers = #tpu.dot_dimension_numbers<[1], [0], [0], [1], [0, 0, 1, 1], [], []>} : vector<16x16xf32>, vector<16x36xf32>, vector<16x36xf32> -> vector<16x36xf32>
    %29 = tpu.concatenate %20, %23, %24, %27, %28 in 1 : vector<16x36xf32>, vector<16x36xf32>, vector<16x36xf32>, vector<16x36xf32>, vector<16x36xf32> -> vector<16x180xf32>
    %30 = tpu.concatenate %15, %29 in 0 : vector<16x180xf32>, vector<16x180xf32> -> vector<32x180xf32>
    %c0_36 = arith.constant 0 : index
    %c0_37 = arith.constant 0 : index
    %31 = vector.load %arg3[%c0_36, %c0_37] : memref<180x64xf32, #tpu.memory_space<vmem>>, vector<180x64xf32>
    %cst_38 = arith.constant dense<0.000000e+00> : vector<32x64xf32>
    %32 = tpu.matmul %30, %31, %cst_38 {dimension_numbers = #tpu.dot_dimension_numbers<[1], [0], [0], [1], [0, 0, 1, 1], [], []>} : vector<32x180xf32>, vector<180x64xf32>, vector<32x64xf32> -> vector<32x64xf32>
    %c0_39 = arith.constant 0 : index
    %c0_40 = arith.constant 0 : index
    %33 = vector.load %arg4[%c0_39, %c0_40] : memref<1x64xf32, #tpu.memory_space<vmem>>, vector<1x64xf32>
    %34 = vector.broadcast %33 : vector<1x64xf32> to vector<32x64xf32>
    %35 = arith.addf %32, %34 : vector<32x64xf32>
    %36 = arith.negf %35 : vector<32x64xf32>
    %37 = math.exp %36 : vector<32x64xf32>
    %cst_41 = arith.constant 1.000000e+00 : f32
    %38 = vector.broadcast %cst_41 : f32 to vector<32x64xf32>
    %39 = arith.addf %38, %37 : vector<32x64xf32>
    %40 = arith.divf %38, %39 : vector<32x64xf32>
    %41 = vector.extract_strided_slice %40 {offsets = [0, 0], sizes = [32, 32], strides = [1, 1]} : vector<32x64xf32> to vector<32x32xf32>
    %42 = vector.extract_strided_slice %40 {offsets = [0, 32], sizes = [32, 32], strides = [1, 1]} : vector<32x64xf32> to vector<32x32xf32>
    %43 = arith.mulf %41, %1 : vector<32x32xf32>
    %c0_42 = arith.constant 0 : index
    %c0_43 = arith.constant 0 : index
    %c0_44 = arith.constant 0 : index
    %44 = vector.load %arg0[%c0_42, %c0_43, %c0_44] : memref<2x16x4xf32, #tpu.memory_space<vmem>>, vector<1x16x4xf32>
    %45 = vector.shape_cast %44 : vector<1x16x4xf32> to vector<16x4xf32>
    %46 = vector.extract_strided_slice %43 {offsets = [0, 0], sizes = [16, 32], strides = [1, 1]} : vector<32x32xf32> to vector<16x32xf32>
    %47 = tpu.concatenate %45, %46 in 1 : vector<16x4xf32>, vector<16x32xf32> -> vector<16x36xf32>
    %c0_45 = arith.constant 0 : index
    %c0_46 = arith.constant 0 : index
    %c0_47 = arith.constant 0 : index
    %c0_48 = arith.constant 0 : index
    %48 = vector.load %arg2[%c0_45, %c0_46, %c0_47, %c0_48] : memref<2x2x16x16xf32, #tpu.memory_space<vmem>>, vector<1x1x16x16xf32>
    %49 = vector.shape_cast %48 : vector<1x1x16x16xf32> to vector<16x16xf32>
    %cst_49 = arith.constant dense<0.000000e+00> : vector<16x36xf32>
    %50 = tpu.matmul %49, %47, %cst_49 {dimension_numbers = #tpu.dot_dimension_numbers<[1], [0], [0], [1], [0, 0, 1, 1], [], []>} : vector<16x16xf32>, vector<16x36xf32>, vector<16x36xf32> -> vector<16x36xf32>
    %cst_50 = arith.constant dense<0.000000e+00> : vector<16x36xf32>
    %51 = tpu.matmul %49, %50, %cst_50 {dimension_numbers = #tpu.dot_dimension_numbers<[1], [0], [0], [1], [0, 0, 1, 1], [], []>} : vector<16x16xf32>, vector<16x36xf32>, vector<16x36xf32> -> vector<16x36xf32>
    %c0_51 = arith.constant 0 : index
    %c1_52 = arith.constant 1 : index
    %c0_53 = arith.constant 0 : index
    %c0_54 = arith.constant 0 : index
    %52 = vector.load %arg2[%c0_51, %c1_52, %c0_53, %c0_54] : memref<2x2x16x16xf32, #tpu.memory_space<vmem>>, vector<1x1x16x16xf32>
    %53 = vector.shape_cast %52 : vector<1x1x16x16xf32> to vector<16x16xf32>
    %cst_55 = arith.constant dense<0.000000e+00> : vector<16x36xf32>
    %54 = tpu.matmul %53, %47, %cst_55 {dimension_numbers = #tpu.dot_dimension_numbers<[1], [0], [0], [1], [0, 0, 1, 1], [], []>} : vector<16x16xf32>, vector<16x36xf32>, vector<16x36xf32> -> vector<16x36xf32>
    %cst_56 = arith.constant dense<0.000000e+00> : vector<16x36xf32>
    %55 = tpu.matmul %53, %54, %cst_56 {dimension_numbers = #tpu.dot_dimension_numbers<[1], [0], [0], [1], [0, 0, 1, 1], [], []>} : vector<16x16xf32>, vector<16x36xf32>, vector<16x36xf32> -> vector<16x36xf32>
    %56 = tpu.concatenate %47, %50, %51, %54, %55 in 1 : vector<16x36xf32>, vector<16x36xf32>, vector<16x36xf32>, vector<16x36xf32>, vector<16x36xf32> -> vector<16x180xf32>
    %c1_57 = arith.constant 1 : index
    %c0_58 = arith.constant 0 : index
    %c0_59 = arith.constant 0 : index
    %57 = vector.load %arg0[%c1_57, %c0_58, %c0_59] : memref<2x16x4xf32, #tpu.memory_space<vmem>>, vector<1x16x4xf32>
    %58 = vector.shape_cast %57 : vector<1x16x4xf32> to vector<16x4xf32>
    %59 = vector.extract_strided_slice %43 {offsets = [16, 0], sizes = [16, 32], strides = [1, 1]} : vector<32x32xf32> to vector<16x32xf32>
    %60 = tpu.concatenate %58, %59 in 1 : vector<16x4xf32>, vector<16x32xf32> -> vector<16x36xf32>
    %c1_60 = arith.constant 1 : index
    %c0_61 = arith.constant 0 : index
    %c0_62 = arith.constant 0 : index
    %c0_63 = arith.constant 0 : index
    %61 = vector.load %arg2[%c1_60, %c0_61, %c0_62, %c0_63] : memref<2x2x16x16xf32, #tpu.memory_space<vmem>>, vector<1x1x16x16xf32>
    %62 = vector.shape_cast %61 : vector<1x1x16x16xf32> to vector<16x16xf32>
    %cst_64 = arith.constant dense<0.000000e+00> : vector<16x36xf32>
    %63 = tpu.matmul %62, %60, %cst_64 {dimension_numbers = #tpu.dot_dimension_numbers<[1], [0], [0], [1], [0, 0, 1, 1], [], []>} : vector<16x16xf32>, vector<16x36xf32>, vector<16x36xf32> -> vector<16x36xf32>
    %cst_65 = arith.constant dense<0.000000e+00> : vector<16x36xf32>
    %64 = tpu.matmul %62, %63, %cst_65 {dimension_numbers = #tpu.dot_dimension_numbers<[1], [0], [0], [1], [0, 0, 1, 1], [], []>} : vector<16x16xf32>, vector<16x36xf32>, vector<16x36xf32> -> vector<16x36xf32>
    %c1_66 = arith.constant 1 : index
    %c1_67 = arith.constant 1 : index
    %c0_68 = arith.constant 0 : index
    %c0_69 = arith.constant 0 : index
    %65 = vector.load %arg2[%c1_66, %c1_67, %c0_68, %c0_69] : memref<2x2x16x16xf32, #tpu.memory_space<vmem>>, vector<1x1x16x16xf32>
    %66 = vector.shape_cast %65 : vector<1x1x16x16xf32> to vector<16x16xf32>
    %cst_70 = arith.constant dense<0.000000e+00> : vector<16x36xf32>
    %67 = tpu.matmul %66, %60, %cst_70 {dimension_numbers = #tpu.dot_dimension_numbers<[1], [0], [0], [1], [0, 0, 1, 1], [], []>} : vector<16x16xf32>, vector<16x36xf32>, vector<16x36xf32> -> vector<16x36xf32>
    %cst_71 = arith.constant dense<0.000000e+00> : vector<16x36xf32>
    %68 = tpu.matmul %66, %67, %cst_71 {dimension_numbers = #tpu.dot_dimension_numbers<[1], [0], [0], [1], [0, 0, 1, 1], [], []>} : vector<16x16xf32>, vector<16x36xf32>, vector<16x36xf32> -> vector<16x36xf32>
    %69 = tpu.concatenate %60, %63, %64, %67, %68 in 1 : vector<16x36xf32>, vector<16x36xf32>, vector<16x36xf32>, vector<16x36xf32>, vector<16x36xf32> -> vector<16x180xf32>
    %70 = tpu.concatenate %56, %69 in 0 : vector<16x180xf32>, vector<16x180xf32> -> vector<32x180xf32>
    %c0_72 = arith.constant 0 : index
    %c0_73 = arith.constant 0 : index
    %71 = vector.load %arg5[%c0_72, %c0_73] : memref<180x32xf32, #tpu.memory_space<vmem>>, vector<180x32xf32>
    %cst_74 = arith.constant dense<0.000000e+00> : vector<32x32xf32>
    %72 = tpu.matmul %70, %71, %cst_74 {dimension_numbers = #tpu.dot_dimension_numbers<[1], [0], [0], [1], [0, 0, 1, 1], [], []>} : vector<32x180xf32>, vector<180x32xf32>, vector<32x32xf32> -> vector<32x32xf32>
    %c0_75 = arith.constant 0 : index
    %c0_76 = arith.constant 0 : index
    %73 = vector.load %arg6[%c0_75, %c0_76] : memref<1x32xf32, #tpu.memory_space<vmem>>, vector<1x32xf32>
    %74 = vector.broadcast %73 : vector<1x32xf32> to vector<32x32xf32>
    %75 = arith.addf %72, %74 : vector<32x32xf32>
    %76 = math.tanh %75 : vector<32x32xf32>
    %77 = arith.mulf %42, %1 : vector<32x32xf32>
    %cst_77 = arith.constant 1.000000e+00 : f32
    %78 = vector.broadcast %cst_77 : f32 to vector<32x32xf32>
    %79 = arith.subf %78, %42 : vector<32x32xf32>
    %80 = arith.mulf %79, %76 : vector<32x32xf32>
    %81 = arith.addf %77, %80 : vector<32x32xf32>
    %c0_78 = arith.constant 0 : index
    %c0_79 = arith.constant 0 : index
    %82 = vector.load %arg7[%c0_78, %c0_79] : memref<32x32xf32, #tpu.memory_space<vmem>>, vector<32x32xf32>
    tpu.vector_store %arg7[%c0_78, %c0_79], %81 {strides = array<i32>} : memref<32x32xf32, #tpu.memory_space<vmem>>, vector<32x32xf32>,
    return
  }
}

</mosaic_0001>

<llo_original>
// kernel: tpu_custom_call.1
$region0: #{tpu_custom_call.1}
  #allocation0 [shape = 'u32[]', space=smem, size = 0x4, offset = 0x4, fixed_abs, tag = 'smem constant byte address 0x4 - core index']
  #allocation1 [shape = 'u32[144,128]{1,0:T(1,128)}', space=vmem, size = 0x12000, scoped, tag = 'internal scratch']
  %s0 = inlined_call_operand.vmem [shape: f32[2,16,4], index: 0, kind: input, shape index: {}]
  %s1 = inlined_call_operand.vmem [shape: f32[2,16,32], index: 1, kind: input, shape index: {}]
  %s2 = inlined_call_operand.vmem [shape: f32[2,2,16,16], index: 2, kind: input, shape index: {}]
  %s3 = inlined_call_operand.vmem [shape: f32[180,64], index: 3, kind: input, shape index: {}]
  %s4 = inlined_call_operand.vmem [shape: f32[1,64], index: 4, kind: input, shape index: {}]
  %s5 = inlined_call_operand.vmem [shape: f32[180,32], index: 5, kind: input, shape index: {}]
  %s6 = inlined_call_operand.vmem [shape: f32[1,32], index: 6, kind: input, shape index: {}]
  %s7 = inlined_call_operand.hbm [shape: f32[32,32], index: 7, kind: output, shape index: {}]
  %s8 = sld [smem:[#allocation0]]
  $region38: #{tpu_custom_call.1} parent=0
    _
  %s10 = ssub.s32 1, %s8
  %s11 = scalar_select 0, %s10, %s8
  $region1: #{tpu_custom_call.1} parent=0
    #allocation2 [shape = 'u8[16384]{0}', space=vmem, size = 0x4000, scoped, tag = 'output window, operand 0, single buffered']
    #allocation3 [shape = 's32[1]{0}', space=sflag, size = 0x4, scoped, tag = 'scoped memory for tpu_custom_call.1']
    %12 = vsyncpa [#allocation3], 0
    // Predicated region
    $region2: #{tpu_custom_call.1} parent=1 // pred_check
      _
    $region3: #{tpu_custom_call.1} parent=1 // pred_check_branch
      %14 = sbr.rel (0) target = $region5
    $region4: #{tpu_custom_call.1} parent=1 // pred_region
      _
    $region5: #{tpu_custom_call.1} parent=1 // pred_fallthru
      _
    // Predicated region
    $region6: #{tpu_custom_call.1} parent=1 // pred_check
      _
    $region7: #{tpu_custom_call.1} parent=1 // pred_check_branch
      %16 = sbr.rel (0) target = $region9
    $region8: #{tpu_custom_call.1} parent=1 // pred_region
      _
    $region9: #{tpu_custom_call.1} parent=1 // pred_fallthru
      _
    // Predicated region
    $region10: #{tpu_custom_call.1} parent=1 // pred_check
      _
    $region11: #{tpu_custom_call.1} parent=1 // pred_check_branch
      %18 = sbr.rel (0) target = $region13
    $region12: #{tpu_custom_call.1} parent=1 // pred_region
      _
    $region13: #{tpu_custom_call.1} parent=1 // pred_fallthru
      _
    // Predicated region
    $region14: #{tpu_custom_call.1} parent=1 // pred_check
      _
    $region15: #{tpu_custom_call.1} parent=1 // pred_check_branch
      %20 = sbr.rel (0) target = $region17
    $region16: #{tpu_custom_call.1} parent=1 // pred_region
      _
    $region17: #{tpu_custom_call.1} parent=1 // pred_fallthru
      _
    // Predicated region
    $region18: #{tpu_custom_call.1} parent=1 // pred_check
      _
    $region19: #{tpu_custom_call.1} parent=1 // pred_check_branch
      %22 = sbr.rel (0) target = $region21
    $region20: #{tpu_custom_call.1} parent=1 // pred_region
      _
    $region21: #{tpu_custom_call.1} parent=1 // pred_fallthru
      _
    // Predicated region
    $region22: #{tpu_custom_call.1} parent=1 // pred_check
      _
    $region23: #{tpu_custom_call.1} parent=1 // pred_check_branch
      %24 = sbr.rel (0) target = $region25
    $region24: #{tpu_custom_call.1} parent=1 // pred_region
      _
    $region25: #{tpu_custom_call.1} parent=1 // pred_fallthru
      _
    // Predicated region
    $region26: #{tpu_custom_call.1} parent=1 // pred_check
      _
    $region27: #{tpu_custom_call.1} parent=1 // pred_check_branch
      %26 = sbr.rel (0) target = $region29
    $region28: #{tpu_custom_call.1} parent=1 // pred_region
      _
    $region29: #{tpu_custom_call.1} parent=1 // pred_fallthru
      _
    %v27 = vld [vmem:[%s1] sm:$0xff]
    %v28 = vld [vmem:[%s1 + $0x8] sm:$0xff]
    %v29 = vld [vmem:[%s1 + $0x10] sm:$0xff]
    %v30 = vld [vmem:[%s1 + $0x18] sm:$0xff]
    %v31 = vld [vmem:[%s0] sm:$0xff]
    %v32 = vld [vmem:[%s0 + $0x8] sm:$0xff]
    %35 = vrot.lane.b32.xlu0 %v27, 4
    %v36 = vpop.permute.xlu0 %35
    %37 = vrot.lane.b32.xlu0 %v28, 4
    %v38 = vpop.permute.xlu0 %37
    %vm41 = vcmask 31744
    %v42 = vsel %vm41, %v31, %v36
    %v43 = vsel %vm41, %v32, %v38
    %v44 = vld [vmem:[%s2] sm:$0xff]
    %v45 = vld [vmem:[%s2 + $0x8] sm:$0xff]
    %vm46 = vcmask 130048
    %v48 = vsel %vm46, %v44, 0
    %v51 = vsel %vm46, %v45, 0
    %53 = vmatprep.subr.mxu0 0.0
    %54 = vmatpush1.msra.mxu0 %v42
    %55 = vmatprep.subr.mxu0 0.0
    %56 = vmatpush1.msra.mxu0 %v43
    %57 = vmatprep.subr.mxu0 0.0
    %58 = vmatpush1.msra.mxu0 0.0
    %59 = vmatprep.subr.mxu0 0.0
    %60 = vmatpush1.msra.mxu0 0.0
    %61 = vmatprep.subr.mxu0 0.0
    %62 = vmatpush1.msra.mxu0 0.0
    %63 = vmatprep.subr.mxu0 0.0
    %64 = vmatpush1.msra.mxu0 0.0
    %65 = vmatprep.subr.mxu0 0.0
    %66 = vmatpush1.msra.mxu0 0.0
    %67 = vmatprep.subr.mxu0 0.0
    %68 = vmatpush1.msra.mxu0 0.0
    %69 = vmatprep.subr.mxu0 0.0
    %70 = vmatpush1.msra.mxu0 0.0
    %71 = vmatprep.subr.mxu0 0.0
    %72 = vmatpush1.msra.mxu0 0.0
    %73 = vmatprep.subr.mxu0 0.0
    %74 = vmatpush1.msra.mxu0 0.0
    %75 = vmatprep.subr.mxu0 0.0
    %76 = vmatpush1.msra.mxu0 0.0
    %77 = vmatprep.subr.mxu0 0.0
    %78 = vmatpush1.msra.mxu0 0.0
    %79 = vmatprep.subr.mxu0 0.0
    %80 = vmatpush1.msra.mxu0 0.0
    %81 = vmatprep.subr.mxu0 0.0
    %82 = vmatpush1.msra.mxu0 0.0
    %83 = vmatprep.subr.mxu0 0.0
    %84 = vmatpush1.msra.mxu0 0.0
    %85 = vmatprep.subr.mxu0 0.0
    %86 = vmatpush1.msra.mxu0 0.0
    %87 = vmatprep.subr.mxu0 0.0
    %88 = vmatpush1.msra.mxu0 0.0
    %89 = vmatprep.subr.mxu0 0.0
    %90 = vmatpush1.msra.mxu0 0.0
    %91 = vmatprep.subr.mxu0 0.0
    %92 = vmatpush1.msra.mxu0 0.0
    %93 = vmatprep.subr.mxu0 0.0
    %94 = vmatpush1.msra.mxu0 0.0
    %95 = vmatprep.subr.mxu0 0.0
    %96 = vmatpush1.msra.mxu0 0.0
    %97 = vmatprep.subr.mxu0 0.0
    %98 = vmatpush1.msra.mxu0 0.0
    %99 = vmatprep.subr.mxu0 0.0
    %100 = vmatpush1.msra.mxu0 0.0
    %101 = vmatprep.subr.mxu0 0.0
    %102 = vmatpush1.msra.mxu0 0.0
    %103 = vmatprep.subr.mxu0 0.0
    %104 = vmatpush1.msra.mxu0 0.0
    %105 = vmatprep.subr.mxu0 0.0
    %106 = vmatpush1.msra.mxu0 0.0
    %107 = vmatprep.subr.mxu0 0.0
    %108 = vmatpush1.msra.mxu0 0.0
    %109 = vmatprep.subr.mxu0 0.0
    %110 = vmatpush1.msra.mxu0 0.0
    %111 = vmatprep.subr.mxu0 0.0
    %112 = vmatpush1.msra.mxu0 0.0
    %113 = vmatprep.subr.mxu0 0.0
    %114 = vmatpush1.msra.mxu0 0.0
    %115 = vmatprep.subr.mxu0 0.0
    %116 = vmatpush1.msra.mxu0 0.0
    %117 = vmatprep.mubr.f32.mxu0 0.0
    %118 = vmatmul.mubr.f32.gmra.mrb[0].mxu0 %v48
    %v119 = vpop.f32.mrb[0].mxu0
    %v120 = vadd.f32 0.0, %v119
    %v121 = vpop.f32.mrb[0].mxu0
    %122 = vmatprep.mubr.f32.mxu0 0.0
    %123 = vmatmul.mubr.f32.gmra.mrb[0].mxu0 %v51
    %v124 = vpop.f32.mrb[0].mxu0
    %v125 = vadd.f32 0.0, %v124
    %v126 = vpop.f32.mrb[0].mxu0
    %127 = vdwg.mxu0
    %128 = vmatprep.subr.mxu0 0.0
    %129 = vmatpush1.msra.mxu0 %v120
    %130 = vmatprep.subr.mxu0 0.0
    %131 = vmatpush1.msra.mxu0 %v125
    %132 = vmatprep.subr.mxu0 0.0
    %133 = vmatpush1.msra.mxu0 0.0
    %134 = vmatprep.subr.mxu0 0.0
    %135 = vmatpush1.msra.mxu0 0.0
    %136 = vmatprep.subr.mxu0 0.0
    %137 = vmatpush1.msra.mxu0 0.0
    %138 = vmatprep.subr.mxu0 0.0
    %139 = vmatpush1.msra.mxu0 0.0
    %140 = vmatprep.subr.mxu0 0.0
    %141 = vmatpush1.msra.mxu0 0.0
    %142 = vmatprep.subr.mxu0 0.0
    %143 = vmatpush1.msra.mxu0 0.0
    %144 = vmatprep.subr.mxu0 0.0
    %145 = vmatpush1.msra.mxu0 0.0
    %146 = vmatprep.subr.mxu0 0.0
    %147 = vmatpush1.msra.mxu0 0.0
    %148 = vmatprep.subr.mxu0 0.0
    %149 = vmatpush1.msra.mxu0 0.0
    %150 = vmatprep.subr.mxu0 0.0
    %151 = vmatpush1.msra.mxu0 0.0
    %152 = vmatprep.subr.mxu0 0.0
    %153 = vmatpush1.msra.mxu0 0.0
    %154 = vmatprep.subr.mxu0 0.0
    %155 = vmatpush1.msra.mxu0 0.0
    %156 = vmatprep.subr.mxu0 0.0
    %157 = vmatpush1.msra.mxu0 0.0
    %158 = vmatprep.subr.mxu0 0.0
    %159 = vmatpush1.msra.mxu0 0.0
    %160 = vmatprep.subr.mxu0 0.0
    %161 = vmatpush1.msra.mxu0 0.0
    %162 = vmatprep.subr.mxu0 0.0
    %163 = vmatpush1.msra.mxu0 0.0
    %164 = vmatprep.subr.mxu0 0.0
    %165 = vmatpush1.msra.mxu0 0.0
    %166 = vmatprep.subr.mxu0 0.0
    %167 = vmatpush1.msra.mxu0 0.0
    %168 = vmatprep.subr.mxu0 0.0
    %169 = vmatpush1.msra.mxu0 0.0
    %170 = vmatprep.subr.mxu0 0.0
    %171 = vmatpush1.msra.mxu0 0.0
    %172 = vmatprep.subr.mxu0 0.0
    %173 = vmatpush1.msra.mxu0 0.0
    %174 = vmatprep.subr.mxu0 0.0
    %175 = vmatpush1.msra.mxu0 0.0
    %176 = vmatprep.subr.mxu0 0.0
    %177 = vmatpush1.msra.mxu0 0.0
    %178 = vmatprep.subr.mxu0 0.0
    %179 = vmatpush1.msra.mxu0 0.0
    %180 = vmatprep.subr.mxu0 0.0
    %181 = vmatpush1.msra.mxu0 0.0
    %182 = vmatprep.subr.mxu0 0.0
    %183 = vmatpush1.msra.mxu0 0.0
    %184 = vmatprep.subr.mxu0 0.0
    %185 = vmatpush1.msra.mxu0 0.0
    %186 = vmatprep.subr.mxu0 0.0
    %187 = vmatpush1.msra.mxu0 0.0
    %188 = vmatprep.subr.mxu0 0.0
    %189 = vmatpush1.msra.mxu0 0.0
    %190 = vmatprep.subr.mxu0 0.0
    %191 = vmatpush1.msra.mxu0 0.0
    %192 = vmatprep.mubr.f32.mxu0 0.0
    %193 = vmatmul.mubr.f32.gmra.mrb[0].mxu0 %v48
    %v194 = vpop.f32.mrb[0].mxu0
    %v195 = vadd.f32 0.0, %v194
    %v196 = vpop.f32.mrb[0].mxu0
    %197 = vmatprep.mubr.f32.mxu0 0.0
    %198 = vmatmul.mubr.f32.gmra.mrb[0].mxu0 %v51
    %v199 = vpop.f32.mrb[0].mxu0
    %v200 = vadd.f32 0.0, %v199
    %v201 = vpop.f32.mrb[0].mxu0
    %202 = vdwg.mxu0
    %s203 = scalar_lea.vmem %s2, 16
    %v204 = vld [vmem:[%s203] sm:$0xff]
    %v205 = vld [vmem:[%s203 + $0x8] sm:$0xff]
    %v207 = vsel %vm46, %v204, 0
    %v210 = vsel %vm46, %v205, 0
    %212 = vmatprep.subr.mxu0 0.0
    %213 = vmatpush1.msra.mxu0 %v42
    %214 = vmatprep.subr.mxu0 0.0
    %215 = vmatpush1.msra.mxu0 %v43
    %216 = vmatprep.subr.mxu0 0.0
    %217 = vmatpush1.msra.mxu0 0.0
    %218 = vmatprep.subr.mxu0 0.0
    %219 = vmatpush1.msra.mxu0 0.0
    %220 = vmatprep.subr.mxu0 0.0
    %221 = vmatpush1.msra.mxu0 0.0
    %222 = vmatprep.subr.mxu0 0.0
    %223 = vmatpush1.msra.mxu0 0.0
    %224 = vmatprep.subr.mxu0 0.0
    %225 = vmatpush1.msra.mxu0 0.0
    %226 = vmatprep.subr.mxu0 0.0
    %227 = vmatpush1.msra.mxu0 0.0
    %228 = vmatprep.subr.mxu0 0.0
    %229 = vmatpush1.msra.mxu0 0.0
    %230 = vmatprep.subr.mxu0 0.0
    %231 = vmatpush1.msra.mxu0 0.0
    %232 = vmatprep.subr.mxu0 0.0
    %233 = vmatpush1.msra.mxu0 0.0
    %234 = vmatprep.subr.mxu0 0.0
    %235 = vmatpush1.msra.mxu0 0.0
    %236 = vmatprep.subr.mxu0 0.0
    %237 = vmatpush1.msra.mxu0 0.0
    %238 = vmatprep.subr.mxu0 0.0
    %239 = vmatpush1.msra.mxu0 0.0
    %240 = vmatprep.subr.mxu0 0.0
    %241 = vmatpush1.msra.mxu0 0.0
    %242 = vmatprep.subr.mxu0 0.0
    %243 = vmatpush1.msra.mxu0 0.0
    %244 = vmatprep.subr.mxu0 0.0
    %245 = vmatpush1.msra.mxu0 0.0
    %246 = vmatprep.subr.mxu0 0.0
    %247 = vmatpush1.msra.mxu0 0.0
    %248 = vmatprep.subr.mxu0 0.0
    %249 = vmatpush1.msra.mxu0 0.0
    %250 = vmatprep.subr.mxu0 0.0
    %251 = vmatpush1.msra.mxu0 0.0
    %252 = vmatprep.subr.mxu0 0.0
    %253 = vmatpush1.msra.mxu0 0.0
    %254 = vmatprep.subr.mxu0 0.0
    %255 = vmatpush1.msra.mxu0 0.0
    %256 = vmatprep.subr.mxu0 0.0
    %257 = vmatpush1.msra.mxu0 0.0
    %258 = vmatprep.subr.mxu0 0.0
    %259 = vmatpush1.msra.mxu0 0.0
    %260 = vmatprep.subr.mxu0 0.0
    %261 = vmatpush1.msra.mxu0 0.0
    %262 = vmatprep.subr.mxu0 0.0
    %263 = vmatpush1.msra.mxu0 0.0
    %264 = vmatprep.subr.mxu0 0.0
    %265 = vmatpush1.msra.mxu0 0.0
    %266 = vmatprep.subr.mxu0 0.0
    %267 = vmatpush1.msra.mxu0 0.0
    %268 = vmatprep.subr.mxu0 0.0
    %269 = vmatpush1.msra.mxu0 0.0
    %270 = vmatprep.subr.mxu0 0.0
    %271 = vmatpush1.msra.mxu0 0.0
    %272 = vmatprep.subr.mxu0 0.0
    %273 = vmatpush1.msra.mxu0 0.0
    %274 = vmatprep.subr.mxu0 0.0
    %275 = vmatpush1.msra.mxu0 0.0
    %276 = vmatprep.mubr.f32.mxu0 0.0
    %277 = vmatmul.mubr.f32.gmra.mrb[0].mxu0 %v207
    %v278 = vpop.f32.mrb[0].mxu0
    %v279 = vadd.f32 0.0, %v278
    %v280 = vpop.f32.mrb[0].mxu0
    %281 = vmatprep.mubr.f32.mxu0 0.0
    %282 = vmatmul.mubr.f32.gmra.mrb[0].mxu0 %v210
    %v283 = vpop.f32.mrb[0].mxu0
    %v284 = vadd.f32 0.0, %v283
    %v285 = vpop.f32.mrb[0].mxu0
    %286 = vdwg.mxu0
    %287 = vmatprep.subr.mxu0 0.0
    %288 = vmatpush1.msra.mxu0 %v279
    %289 = vmatprep.subr.mxu0 0.0
    %290 = vmatpush1.msra.mxu0 %v284
    %291 = vmatprep.subr.mxu0 0.0
    %292 = vmatpush1.msra.mxu0 0.0
    %293 = vmatprep.subr.mxu0 0.0
    %294 = vmatpush1.msra.mxu0 0.0
    %295 = vmatprep.subr.mxu0 0.0
    %296 = vmatpush1.msra.mxu0 0.0
    %297 = vmatprep.subr.mxu0 0.0
    %298 = vmatpush1.msra.mxu0 0.0
    %299 = vmatprep.subr.mxu0 0.0
    %300 = vmatpush1.msra.mxu0 0.0
    %301 = vmatprep.subr.mxu0 0.0
    %302 = vmatpush1.msra.mxu0 0.0
    %303 = vmatprep.subr.mxu0 0.0
    %304 = vmatpush1.msra.mxu0 0.0
    %305 = vmatprep.subr.mxu0 0.0
    %306 = vmatpush1.msra.mxu0 0.0
    %307 = vmatprep.subr.mxu0 0.0
    %308 = vmatpush1.msra.mxu0 0.0
    %309 = vmatprep.subr.mxu0 0.0
    %310 = vmatpush1.msra.mxu0 0.0
    %311 = vmatprep.subr.mxu0 0.0
    %312 = vmatpush1.msra.mxu0 0.0
    %313 = vmatprep.subr.mxu0 0.0
    %314 = vmatpush1.msra.mxu0 0.0
    %315 = vmatprep.subr.mxu0 0.0
    %316 = vmatpush1.msra.mxu0 0.0
    %317 = vmatprep.subr.mxu0 0.0
    %318 = vmatpush1.msra.mxu0 0.0
    %319 = vmatprep.subr.mxu0 0.0
    %320 = vmatpush1.msra.mxu0 0.0
    %321 = vmatprep.subr.mxu0 0.0
    %322 = vmatpush1.msra.mxu0 0.0
    %323 = vmatprep.subr.mxu0 0.0
    %324 = vmatpush1.msra.mxu0 0.0
    %325 = vmatprep.subr.mxu0 0.0
    %326 = vmatpush1.msra.mxu0 0.0
    %327 = vmatprep.subr.mxu0 0.0
    %328 = vmatpush1.msra.mxu0 0.0
    %329 = vmatprep.subr.mxu0 0.0
    %330 = vmatpush1.msra.mxu0 0.0
    %331 = vmatprep.subr.mxu0 0.0
    %332 = vmatpush1.msra.mxu0 0.0
    %333 = vmatprep.subr.mxu0 0.0
    %334 = vmatpush1.msra.mxu0 0.0
    %335 = vmatprep.subr.mxu0 0.0
    %336 = vmatpush1.msra.mxu0 0.0
    %337 = vmatprep.subr.mxu0 0.0
    %338 = vmatpush1.msra.mxu0 0.0
    %339 = vmatprep.subr.mxu0 0.0
    %340 = vmatpush1.msra.mxu0 0.0
    %341 = vmatprep.subr.mxu0 0.0
    %342 = vmatpush1.msra.mxu0 0.0
    %343 = vmatprep.subr.mxu0 0.0
    %344 = vmatpush1.msra.mxu0 0.0
    %345 = vmatprep.subr.mxu0 0.0
    %346 = vmatpush1.msra.mxu0 0.0
    %347 = vmatprep.subr.mxu0 0.0
    %348 = vmatpush1.msra.mxu0 0.0
    %349 = vmatprep.subr.mxu0 0.0
    %350 = vmatpush1.msra.mxu0 0.0
    %351 = vmatprep.mubr.f32.mxu0 0.0
    %352 = vmatmul.mubr.f32.gmra.mrb[0].mxu0 %v207
    %v353 = vpop.f32.mrb[0].mxu0
    %v354 = vadd.f32 0.0, %v353
    %v355 = vpop.f32.mrb[0].mxu0
    %356 = vmatprep.mubr.f32.mxu0 0.0
    %357 = vmatmul.mubr.f32.gmra.mrb[0].mxu0 %v210
    %v358 = vpop.f32.mrb[0].mxu0
    %v359 = vadd.f32 0.0, %v358
    %v360 = vpop.f32.mrb[0].mxu0
    %361 = vdwg.mxu0
    %364 = vrot.lane.b32.xlu0 %v120, 36
    %v365 = vpop.permute.xlu0 %364
    %366 = vrot.lane.b32.xlu0 %v125, 36
    %v367 = vpop.permute.xlu0 %366
    %372 = vrot.lane.b32.xlu0 %v195, 72
    %v373 = vpop.permute.xlu0 %372
    %374 = vrot.lane.b32.xlu0 %v200, 72
    %v375 = vpop.permute.xlu0 %374
    %380 = vrot.lane.b32.xlu0 %v279, 108
    %v381 = vpop.permute.xlu0 %380
    %382 = vrot.lane.b32.xlu0 %v284, 108
    %v383 = vpop.permute.xlu0 %382
    %388 = vrot.lane.b32.xlu0 %v354, 16
    %v389 = vpop.permute.xlu0 %388
    %390 = vrot.lane.b32.xlu0 %v359, 16
    %v391 = vpop.permute.xlu0 %390
    %vm394 = vcmask 293888
    %v395 = vsel %vm394, %v42, %v365
    %v396 = vsel %vm394, %v43, %v367
    %vm397 = vcmask 588800
    %v398 = vsel %vm397, %v395, %v373
    %v399 = vsel %vm397, %v396, %v375
    %vm400 = vcmask 883712
    %v401 = vsel %vm400, %v398, %v381
    %v402 = vsel %vm400, %v399, %v383
    %v403 = vsel %vm46, %v381, %v389
    %v404 = vsel %vm46, %v383, %v391
    %s405 = scalar_lea.vmem %s0, 16
    %v406 = vld [vmem:[%s405] sm:$0xff]
    %v407 = vld [vmem:[%s405 + $0x8] sm:$0xff]
    %s408 = scalar_lea.vmem %s1, 16
    %v409 = vld [vmem:[%s408] sm:$0xff]
    %v410 = vld [vmem:[%s408 + $0x8] sm:$0xff]
    %413 = vrot.lane.b32.xlu0 %v409, 4
    %v414 = vpop.permute.xlu0 %413
    %415 = vrot.lane.b32.xlu0 %v410, 4
    %v416 = vpop.permute.xlu0 %415
    %v419 = vsel %vm41, %v406, %v414
    %v420 = vsel %vm41, %v407, %v416
    %s421 = scalar_lea.vmem %s2, 32
    %v422 = vld [vmem:[%s421] sm:$0xff]
    %v423 = vld [vmem:[%s421 + $0x8] sm:$0xff]
    %v425 = vsel %vm46, %v422, 0
    %v428 = vsel %vm46, %v423, 0
    %430 = vmatprep.subr.mxu0 0.0
    %431 = vmatpush1.msra.mxu0 %v419
    %432 = vmatprep.subr.mxu0 0.0
    %433 = vmatpush1.msra.mxu0 %v420
    %434 = vmatprep.subr.mxu0 0.0
    %435 = vmatpush1.msra.mxu0 0.0
    %436 = vmatprep.subr.mxu0 0.0
    %437 = vmatpush1.msra.mxu0 0.0
    %438 = vmatprep.subr.mxu0 0.0
    %439 = vmatpush1.msra.mxu0 0.0
    %440 = vmatprep.subr.mxu0 0.0
    %441 = vmatpush1.msra.mxu0 0.0
    %442 = vmatprep.subr.mxu0 0.0
    %443 = vmatpush1.msra.mxu0 0.0
    %444 = vmatprep.subr.mxu0 0.0
    %445 = vmatpush1.msra.mxu0 0.0
    %446 = vmatprep.subr.mxu0 0.0
    %447 = vmatpush1.msra.mxu0 0.0
    %448 = vmatprep.subr.mxu0 0.0
    %449 = vmatpush1.msra.mxu0 0.0
    %450 = vmatprep.subr.mxu0 0.0
    %451 = vmatpush1.msra.mxu0 0.0
    %452 = vmatprep.subr.mxu0 0.0
    %453 = vmatpush1.msra.mxu0 0.0
    %454 = vmatprep.subr.mxu0 0.0
    %455 = vmatpush1.msra.mxu0 0.0
    %456 = vmatprep.subr.mxu0 0.0
    %457 = vmatpush1.msra.mxu0 0.0
    %458 = vmatprep.subr.mxu0 0.0
    %459 = vmatpush1.msra.mxu0 0.0
    %460 = vmatprep.subr.mxu0 0.0
    %461 = vmatpush1.msra.mxu0 0.0
    %462 = vmatprep.subr.mxu0 0.0
    %463 = vmatpush1.msra.mxu0 0.0
    %464 = vmatprep.subr.mxu0 0.0
    %465 = vmatpush1.msra.mxu0 0.0
    %466 = vmatprep.subr.mxu0 0.0
    %467 = vmatpush1.msra.mxu0 0.0
    %468 = vmatprep.subr.mxu0 0.0
    %469 = vmatpush1.msra.mxu0 0.0
    %470 = vmatprep.subr.mxu0 0.0
    %471 = vmatpush1.msra.mxu0 0.0
    %472 = vmatprep.subr.mxu0 0.0
    %473 = vmatpush1.msra.mxu0 0.0
    %474 = vmatprep.subr.mxu0 0.0
    %475 = vmatpush1.msra.mxu0 0.0
    %476 = vmatprep.subr.mxu0 0.0
    %477 = vmatpush1.msra.mxu0 0.0
    %478 = vmatprep.subr.mxu0 0.0
    %479 = vmatpush1.msra.mxu0 0.0
    %480 = vmatprep.subr.mxu0 0.0
    %481 = vmatpush1.msra.mxu0 0.0
    %482 = vmatprep.subr.mxu0 0.0
    %483 = vmatpush1.msra.mxu0 0.0
    %484 = vmatprep.subr.mxu0 0.0
    %485 = vmatpush1.msra.mxu0 0.0
    %486 = vmatprep.subr.mxu0 0.0
    %487 = vmatpush1.msra.mxu0 0.0
    %488 = vmatprep.subr.mxu0 0.0
    %489 = vmatpush1.msra.mxu0 0.0
    %490 = vmatprep.subr.mxu0 0.0
    %491 = vmatpush1.msra.mxu0 0.0
    %492 = vmatprep.subr.mxu0 0.0
    %493 = vmatpush1.msra.mxu0 0.0
    %494 = vmatprep.mubr.f32.mxu0 0.0
    %495 = vmatmul.mubr.f32.gmra.mrb[0].mxu0 %v425
    %v496 = vpop.f32.mrb[0].mxu0
    %v497 = vadd.f32 0.0, %v496
    %v498 = vpop.f32.mrb[0].mxu0
    %499 = vmatprep.mubr.f32.mxu0 0.0
    %500 = vmatmul.mubr.f32.gmra.mrb[0].mxu0 %v428
    %v501 = vpop.f32.mrb[0].mxu0
    %v502 = vadd.f32 0.0, %v501
    %v503 = vpop.f32.mrb[0].mxu0
    %504 = vdwg.mxu0
    %505 = vmatprep.subr.mxu0 0.0
    %506 = vmatpush1.msra.mxu0 %v497
    %507 = vmatprep.subr.mxu0 0.0
    %508 = vmatpush1.msra.mxu0 %v502
    %509 = vmatprep.subr.mxu0 0.0
    %510 = vmatpush1.msra.mxu0 0.0
    %511 = vmatprep.subr.mxu0 0.0
    %512 = vmatpush1.msra.mxu0 0.0
    %513 = vmatprep.subr.mxu0 0.0
    %514 = vmatpush1.msra.mxu0 0.0
    %515 = vmatprep.subr.mxu0 0.0
    %516 = vmatpush1.msra.mxu0 0.0
    %517 = vmatprep.subr.mxu0 0.0
    %518 = vmatpush1.msra.mxu0 0.0
    %519 = vmatprep.subr.mxu0 0.0
    %520 = vmatpush1.msra.mxu0 0.0
    %521 = vmatprep.subr.mxu0 0.0
    %522 = vmatpush1.msra.mxu0 0.0
    %523 = vmatprep.subr.mxu0 0.0
    %524 = vmatpush1.msra.mxu0 0.0
    %525 = vmatprep.subr.mxu0 0.0
    %526 = vmatpush1.msra.mxu0 0.0
    %527 = vmatprep.subr.mxu0 0.0
    %528 = vmatpush1.msra.mxu0 0.0
    %529 = vmatprep.subr.mxu0 0.0
    %530 = vmatpush1.msra.mxu0 0.0
    %531 = vmatprep.subr.mxu0 0.0
    %532 = vmatpush1.msra.mxu0 0.0
    %533 = vmatprep.subr.mxu0 0.0
    %534 = vmatpush1.msra.mxu0 0.0
    %535 = vmatprep.subr.mxu0 0.0
    %536 = vmatpush1.msra.mxu0 0.0
    %537 = vmatprep.subr.mxu0 0.0
    %538 = vmatpush1.msra.mxu0 0.0
    %539 = vmatprep.subr.mxu0 0.0
    %540 = vmatpush1.msra.mxu0 0.0
    %541 = vmatprep.subr.mxu0 0.0
    %542 = vmatpush1.msra.mxu0 0.0
    %543 = vmatprep.subr.mxu0 0.0
    %544 = vmatpush1.msra.mxu0 0.0
    %545 = vmatprep.subr.mxu0 0.0
    %546 = vmatpush1.msra.mxu0 0.0
    %547 = vmatprep.subr.mxu0 0.0
    %548 = vmatpush1.msra.mxu0 0.0
    %549 = vmatprep.subr.mxu0 0.0
    %550 = vmatpush1.msra.mxu0 0.0
    %551 = vmatprep.subr.mxu0 0.0
    %552 = vmatpush1.msra.mxu0 0.0
    %553 = vmatprep.subr.mxu0 0.0
    %554 = vmatpush1.msra.mxu0 0.0
    %555 = vmatprep.subr.mxu0 0.0
    %556 = vmatpush1.msra.mxu0 0.0
    %557 = vmatprep.subr.mxu0 0.0
    %558 = vmatpush1.msra.mxu0 0.0
    %559 = vmatprep.subr.mxu0 0.0
    %560 = vmatpush1.msra.mxu0 0.0
    %561 = vmatprep.subr.mxu0 0.0
    %562 = vmatpush1.msra.mxu0 0.0
    %563 = vmatprep.subr.mxu0 0.0
    %564 = vmatpush1.msra.mxu0 0.0
    %565 = vmatprep.subr.mxu0 0.0
    %566 = vmatpush1.msra.mxu0 0.0
    %567 = vmatprep.subr.mxu0 0.0
    %568 = vmatpush1.msra.mxu0 0.0
    %569 = vmatprep.mubr.f32.mxu0 0.0
    %570 = vmatmul.mubr.f32.gmra.mrb[0].mxu0 %v425
    %v571 = vpop.f32.mrb[0].mxu0
    %v572 = vadd.f32 0.0, %v571
    %v573 = vpop.f32.mrb[0].mxu0
    %574 = vmatprep.mubr.f32.mxu0 0.0
    %575 = vmatmul.mubr.f32.gmra.mrb[0].mxu0 %v428
    %v576 = vpop.f32.mrb[0].mxu0
    %v577 = vadd.f32 0.0, %v576
    %v578 = vpop.f32.mrb[0].mxu0
    %579 = vdwg.mxu0
    %s580 = scalar_lea.vmem %s2, 48
    %v581 = vld [vmem:[%s580] sm:$0xff]
    %v582 = vld [vmem:[%s580 + $0x8] sm:$0xff]
    %v584 = vsel %vm46, %v581, 0
    %v587 = vsel %vm46, %v582, 0
    %589 = vmatprep.subr.mxu0 0.0
    %590 = vmatpush1.msra.mxu0 %v419
    %591 = vmatprep.subr.mxu0 0.0
    %592 = vmatpush1.msra.mxu0 %v420
    %593 = vmatprep.subr.mxu0 0.0
    %594 = vmatpush1.msra.mxu0 0.0
    %595 = vmatprep.subr.mxu0 0.0
    %596 = vmatpush1.msra.mxu0 0.0
    %597 = vmatprep.subr.mxu0 0.0
    %598 = vmatpush1.msra.mxu0 0.0
    %599 = vmatprep.subr.mxu0 0.0
    %600 = vmatpush1.msra.mxu0 0.0
    %601 = vmatprep.subr.mxu0 0.0
    %602 = vmatpush1.msra.mxu0 0.0
    %603 = vmatprep.subr.mxu0 0.0
    %604 = vmatpush1.msra.mxu0 0.0
    %605 = vmatprep.subr.mxu0 0.0
    %606 = vmatpush1.msra.mxu0 0.0
    %607 = vmatprep.subr.mxu0 0.0
    %608 = vmatpush1.msra.mxu0 0.0
    %609 = vmatprep.subr.mxu0 0.0
    %610 = vmatpush1.msra.mxu0 0.0
    %611 = vmatprep.subr.mxu0 0.0
    %612 = vmatpush1.msra.mxu0 0.0
    %613 = vmatprep.subr.mxu0 0.0
    %614 = vmatpush1.msra.mxu0 0.0
    %615 = vmatprep.subr.mxu0 0.0
    %616 = vmatpush1.msra.mxu0 0.0
    %617 = vmatprep.subr.mxu0 0.0
    %618 = vmatpush1.msra.mxu0 0.0
    %619 = vmatprep.subr.mxu0 0.0
    %620 = vmatpush1.msra.mxu0 0.0
    %621 = vmatprep.subr.mxu0 0.0
    %622 = vmatpush1.msra.mxu0 0.0
    %623 = vmatprep.subr.mxu0 0.0
    %624 = vmatpush1.msra.mxu0 0.0
    %625 = vmatprep.subr.mxu0 0.0
    %626 = vmatpush1.msra.mxu0 0.0
    %627 = vmatprep.subr.mxu0 0.0
    %628 = vmatpush1.msra.mxu0 0.0
    %629 = vmatprep.subr.mxu0 0.0
    %630 = vmatpush1.msra.mxu0 0.0
    %631 = vmatprep.subr.mxu0 0.0
    %632 = vmatpush1.msra.mxu0 0.0
    %633 = vmatprep.subr.mxu0 0.0
    %634 = vmatpush1.msra.mxu0 0.0
    %635 = vmatprep.subr.mxu0 0.0
    %636 = vmatpush1.msra.mxu0 0.0
    %637 = vmatprep.subr.mxu0 0.0
    %638 = vmatpush1.msra.mxu0 0.0
    %639 = vmatprep.subr.mxu0 0.0
    %640 = vmatpush1.msra.mxu0 0.0
    %641 = vmatprep.subr.mxu0 0.0
    %642 = vmatpush1.msra.mxu0 0.0
    %643 = vmatprep.subr.mxu0 0.0
    %644 = vmatpush1.msra.mxu0 0.0
    %645 = vmatprep.subr.mxu0 0.0
    %646 = vmatpush1.msra.mxu0 0.0
    %647 = vmatprep.subr.mxu0 0.0
    %648 = vmatpush1.msra.mxu0 0.0
    %649 = vmatprep.subr.mxu0 0.0
    %650 = vmatpush1.msra.mxu0 0.0
    %651 = vmatprep.subr.mxu0 0.0
    %652 = vmatpush1.msra.mxu0 0.0
    %653 = vmatprep.mubr.f32.mxu0 0.0
    %654 = vmatmul.mubr.f32.gmra.mrb[0].mxu0 %v584
    %v655 = vpop.f32.mrb[0].mxu0
    %v656 = vadd.f32 0.0, %v655
    %v657 = vpop.f32.mrb[0].mxu0
    %658 = vmatprep.mubr.f32.mxu0 0.0
    %659 = vmatmul.mubr.f32.gmra.mrb[0].mxu0 %v587
    %v660 = vpop.f32.mrb[0].mxu0
    %v661 = vadd.f32 0.0, %v660
    %v662 = vpop.f32.mrb[0].mxu0
    %663 = vdwg.mxu0
    %664 = vmatprep.subr.mxu0 0.0
    %665 = vmatpush1.msra.mxu0 %v656
    %666 = vmatprep.subr.mxu0 0.0
    %667 = vmatpush1.msra.mxu0 %v661
    %668 = vmatprep.subr.mxu0 0.0
    %669 = vmatpush1.msra.mxu0 0.0
    %670 = vmatprep.subr.mxu0 0.0
    %671 = vmatpush1.msra.mxu0 0.0
    %672 = vmatprep.subr.mxu0 0.0
    %673 = vmatpush1.msra.mxu0 0.0
    %674 = vmatprep.subr.mxu0 0.0
    %675 = vmatpush1.msra.mxu0 0.0
    %676 = vmatprep.subr.mxu0 0.0
    %677 = vmatpush1.msra.mxu0 0.0
    %678 = vmatprep.subr.mxu0 0.0
    %679 = vmatpush1.msra.mxu0 0.0
    %680 = vmatprep.subr.mxu0 0.0
    %681 = vmatpush1.msra.mxu0 0.0
    %682 = vmatprep.subr.mxu0 0.0
    %683 = vmatpush1.msra.mxu0 0.0
    %684 = vmatprep.subr.mxu0 0.0
    %685 = vmatpush1.msra.mxu0 0.0
    %686 = vmatprep.subr.mxu0 0.0
    %687 = vmatpush1.msra.mxu0 0.0
    %688 = vmatprep.subr.mxu0 0.0
    %689 = vmatpush1.msra.mxu0 0.0
    %690 = vmatprep.subr.mxu0 0.0
    %691 = vmatpush1.msra.mxu0 0.0
    %692 = vmatprep.subr.mxu0 0.0
    %693 = vmatpush1.msra.mxu0 0.0
    %694 = vmatprep.subr.mxu0 0.0
    %695 = vmatpush1.msra.mxu0 0.0
    %696 = vmatprep.subr.mxu0 0.0
    %697 = vmatpush1.msra.mxu0 0.0
    %698 = vmatprep.subr.mxu0 0.0
    %699 = vmatpush1.msra.mxu0 0.0
    %700 = vmatprep.subr.mxu0 0.0
    %701 = vmatpush1.msra.mxu0 0.0
    %702 = vmatprep.subr.mxu0 0.0
    %703 = vmatpush1.msra.mxu0 0.0
    %704 = vmatprep.subr.mxu0 0.0
    %705 = vmatpush1.msra.mxu0 0.0
    %706 = vmatprep.subr.mxu0 0.0
    %707 = vmatpush1.msra.mxu0 0.0
    %708 = vmatprep.subr.mxu0 0.0
    %709 = vmatpush1.msra.mxu0 0.0
    %710 = vmatprep.subr.mxu0 0.0
    %711 = vmatpush1.msra.mxu0 0.0
    %712 = vmatprep.subr.mxu0 0.0
    %713 = vmatpush1.msra.mxu0 0.0
    %714 = vmatprep.subr.mxu0 0.0
    %715 = vmatpush1.msra.mxu0 0.0
    %716 = vmatprep.subr.mxu0 0.0
    %717 = vmatpush1.msra.mxu0 0.0
    %718 = vmatprep.subr.mxu0 0.0
    %719 = vmatpush1.msra.mxu0 0.0
    %720 = vmatprep.subr.mxu0 0.0
    %721 = vmatpush1.msra.mxu0 0.0
    %722 = vmatprep.subr.mxu0 0.0
    %723 = vmatpush1.msra.mxu0 0.0
    %724 = vmatprep.subr.mxu0 0.0
    %725 = vmatpush1.msra.mxu0 0.0
    %726 = vmatprep.subr.mxu0 0.0
    %727 = vmatpush1.msra.mxu0 0.0
    %728 = vmatprep.mubr.f32.mxu0 0.0
    %729 = vmatmul.mubr.f32.gmra.mrb[0].mxu0 %v584
    %v730 = vpop.f32.mrb[0].mxu0
    %v731 = vadd.f32 0.0, %v730
    %v732 = vpop.f32.mrb[0].mxu0
    %733 = vmatprep.mubr.f32.mxu0 0.0
    %734 = vmatmul.mubr.f32.gmra.mrb[0].mxu0 %v587
    %v735 = vpop.f32.mrb[0].mxu0
    %v736 = vadd.f32 0.0, %v735
    %v737 = vpop.f32.mrb[0].mxu0
    %738 = vdwg.mxu0
    %741 = vrot.lane.b32.xlu0 %v497, 36
    %v742 = vpop.permute.xlu0 %741
    %743 = vrot.lane.b32.xlu0 %v502, 36
    %v744 = vpop.permute.xlu0 %743
    %749 = vrot.lane.b32.xlu0 %v572, 72
    %v750 = vpop.permute.xlu0 %749
    %751 = vrot.lane.b32.xlu0 %v577, 72
    %v752 = vpop.permute.xlu0 %751
    %757 = vrot.lane.b32.xlu0 %v656, 108
    %v758 = vpop.permute.xlu0 %757
    %759 = vrot.lane.b32.xlu0 %v661, 108
    %v760 = vpop.permute.xlu0 %759
    %765 = vrot.lane.b32.xlu0 %v731, 16
    %v766 = vpop.permute.xlu0 %765
    %767 = vrot.lane.b32.xlu0 %v736, 16
    %v768 = vpop.permute.xlu0 %767
    %v771 = vsel %vm394, %v419, %v742
    %v772 = vsel %vm394, %v420, %v744
    %v773 = vsel %vm397, %v771, %v750
    %v774 = vsel %vm397, %v772, %v752
    %v775 = vsel %vm400, %v773, %v758
    %v776 = vsel %vm400, %v774, %v760
    %v777 = vsel %vm46, %v758, %v766
    %v778 = vsel %vm46, %v760, %v768
    %v779 = vld [vmem:[%s3] sm:$0xff]
    %v780 = vld [vmem:[%s3 + $0x8] sm:$0xff]
    %v781 = vld [vmem:[%s3 + $0x10] sm:$0xff]
    %v782 = vld [vmem:[%s3 + $0x18] sm:$0xff]
    %v783 = vld [vmem:[%s3 + $0x20] sm:$0xff]
    %v784 = vld [vmem:[%s3 + $0x28] sm:$0xff]
    %v785 = vld [vmem:[%s3 + $0x30] sm:$0xff]
    %v786 = vld [vmem:[%s3 + $0x38] sm:$0xff]
    %v787 = vld [vmem:[%s3 + $0x40] sm:$0xff]
    %v788 = vld [vmem:[%s3 + $0x48] sm:$0xff]
    %v789 = vld [vmem:[%s3 + $0x50] sm:$0xff]
    %v790 = vld [vmem:[%s3 + $0x58] sm:$0xff]
    %v791 = vld [vmem:[%s3 + $0x60] sm:$0xff]
    %v792 = vld [vmem:[%s3 + $0x68] sm:$0xff]
    %v793 = vld [vmem:[%s3 + $0x70] sm:$0xff]
    %v794 = vld [vmem:[%s3 + $0x78] sm:$0xff]
    %v795 = vld [vmem:[%s3 + $0x80] sm:$0xff]
    %v796 = vld [vmem:[%s3 + $0x88] sm:$0xff]
    %v797 = vld [vmem:[%s3 + $0x90] sm:$0xff]
    %v798 = vld [vmem:[%s3 + $0x98] sm:$0xff]
    %v799 = vld [vmem:[%s3 + $0xa0] sm:$0xff]
    %v800 = vld [vmem:[%s3 + $0xa8] sm:$0xff]
    %v801 = vld [vmem:[%s3 + $0xb0] sm:$0xf]
    %v802 = vld [vmem:[%s4] sm:$0x1]
    %v804 = vlaneseq
    %v805 = vshrl.u32 %v804, 7
    %v806 = vsub.s32 0, %v805
    %v807 = vrot.slane %v802, %v806
    %vm809 = vcmask 424960
    %v811 = vsel %vm809, %v403, 0
    %v814 = vsel %vm809, %v404, 0
    %v817 = vsel %vm809, %v777, 0
    %v820 = vsel %vm809, %v778, 0
    %vm822 = vcmask 1043456
    %v824 = vsel %vm822, %v801, 0
    %826 = vmatprep.subr.mxu0 0.0
    %827 = vmatpush1.msra.mxu0 %v779
    %828 = vmatprep.subr.mxu0 0.0
    %829 = vmatpush1.msra.mxu0 %v780
    %830 = vmatprep.subr.mxu0 0.0
    %831 = vmatpush1.msra.mxu0 %v781
    %832 = vmatprep.subr.mxu0 0.0
    %833 = vmatpush1.msra.mxu0 %v782
    %834 = vmatprep.subr.mxu0 0.0
    %835 = vmatpush1.msra.mxu0 %v783
    %836 = vmatprep.subr.mxu0 0.0
    %837 = vmatpush1.msra.mxu0 %v784
    %838 = vmatprep.subr.mxu0 0.0
    %839 = vmatpush1.msra.mxu0 %v785
    %840 = vmatprep.subr.mxu0 0.0
    %841 = vmatpush1.msra.mxu0 %v786
    %842 = vmatprep.subr.mxu0 0.0
    %843 = vmatpush1.msra.mxu0 %v787
    %844 = vmatprep.subr.mxu0 0.0
    %845 = vmatpush1.msra.mxu0 %v788
    %846 = vmatprep.subr.mxu0 0.0
    %847 = vmatpush1.msra.mxu0 %v789
    %848 = vmatprep.subr.mxu0 0.0
    %849 = vmatpush1.msra.mxu0 %v790
    %850 = vmatprep.subr.mxu0 0.0
    %851 = vmatpush1.msra.mxu0 %v791
    %852 = vmatprep.subr.mxu0 0.0
    %853 = vmatpush1.msra.mxu0 %v792
    %854 = vmatprep.subr.mxu0 0.0
    %855 = vmatpush1.msra.mxu0 %v793
    %856 = vmatprep.subr.mxu0 0.0
    %857 = vmatpush1.msra.mxu0 %v794
    %858 = vmatprep.subr.mxu0 0.0
    %859 = vmatpush1.msra.mxu0 %v795
    %860 = vmatprep.subr.mxu0 0.0
    %861 = vmatpush1.msra.mxu0 %v796
    %862 = vmatprep.subr.mxu0 0.0
    %863 = vmatpush1.msra.mxu0 %v797
    %864 = vmatprep.subr.mxu0 0.0
    %865 = vmatpush1.msra.mxu0 %v798
    %866 = vmatprep.subr.mxu0 0.0
    %867 = vmatpush1.msra.mxu0 %v799
    %868 = vmatprep.subr.mxu0 0.0
    %869 = vmatpush1.msra.mxu0 %v800
    %870 = vmatprep.subr.mxu0 0.0
    %871 = vmatpush1.msra.mxu0 %v824
    %872 = vmatprep.subr.mxu0 0.0
    %873 = vmatpush1.msra.mxu0 0.0
    %874 = vmatprep.subr.mxu0 0.0
    %875 = vmatpush1.msra.mxu0 0.0
    %876 = vmatprep.subr.mxu0 0.0
    %877 = vmatpush1.msra.mxu0 0.0
    %878 = vmatprep.subr.mxu0 0.0
    %879 = vmatpush1.msra.mxu0 0.0
    %880 = vmatprep.subr.mxu0 0.0
    %881 = vmatpush1.msra.mxu0 0.0
    %882 = vmatprep.subr.mxu0 0.0
    %883 = vmatpush1.msra.mxu0 0.0
    %884 = vmatprep.subr.mxu0 0.0
    %885 = vmatpush1.msra.mxu0 0.0
    %886 = vmatprep.subr.mxu0 0.0
    %887 = vmatpush1.msra.mxu0 0.0
    %888 = vmatprep.subr.mxu0 0.0
    %889 = vmatpush1.msra.mxu0 0.0
    %890 = vmatprep.mubr.f32.mxu0 %v811
    %891 = vmatmul.mubr.f32.gmra.mrb[0].mxu0 %v401
    %v892 = vpop.f32.mrb[0].mxu0
    %v893 = vadd.f32 %v807, %v892
    %v894 = vpop.f32.mrb[0].mxu0
    %895 = vmatprep.mubr.f32.mxu0 %v814
    %896 = vmatmul.mubr.f32.gmra.mrb[0].mxu0 %v402
    %v897 = vpop.f32.mrb[0].mxu0
    %v898 = vadd.f32 %v807, %v897
    %v899 = vpop.f32.mrb[0].mxu0
    %900 = vmatprep.mubr.f32.mxu0 %v817
    %901 = vmatmul.mubr.f32.gmra.mrb[0].mxu0 %v775
    %v902 = vpop.f32.mrb[0].mxu0
    %v903 = vadd.f32 %v807, %v902
    %v904 = vpop.f32.mrb[0].mxu0
    %905 = vmatprep.mubr.f32.mxu0 %v820
    %906 = vmatmul.mubr.f32.gmra.mrb[0].mxu0 %v776
    %v907 = vpop.f32.mrb[0].mxu0
    %v908 = vadd.f32 %v807, %v907
    %v909 = vpop.f32.mrb[0].mxu0
    %910 = vdwg.mxu0
    %v911 = vxor.u32 %v893, 2147483648
    %v912 = vxor.u32 %v898, 2147483648
    %v913 = vxor.u32 %v903, 2147483648
    %v914 = vxor.u32 %v908, 2147483648
    %v915 = vmul.f32 %v911, 1.442695
    %v916 = vpow.pop %v915
    %v917 = vmul.f32 %v912, 1.442695
    %v918 = vpow.pop %v917
    %v919 = vmul.f32 %v913, 1.442695
    %v920 = vpow.pop %v919
    %v921 = vmul.f32 %v914, 1.442695
    %v922 = vpow.pop %v921
    %v923 = vadd.f32 %v916, 1.0
    %v924 = vadd.f32 %v918, 1.0
    %v925 = vadd.f32 %v920, 1.0
    %v926 = vadd.f32 %v922, 1.0
    %v927 = vrcp.pop %v923
    %v928 = vmul.f32 1.0, %v927
    %v929 = vrcp.pop %v924
    %v930 = vmul.f32 1.0, %v929
    %v931 = vrcp.pop %v925
    %v932 = vmul.f32 1.0, %v931
    %v933 = vrcp.pop %v926
    %v934 = vmul.f32 1.0, %v933
    %v935 = vmul.f32 %v928, %v27
    %v936 = vmul.f32 %v930, %v28
    %v937 = vmul.f32 %v932, %v29
    %v938 = vmul.f32 %v934, %v30
    %941 = vrot.lane.b32.xlu0 %v935, 4
    %v942 = vpop.permute.xlu0 %941
    %943 = vrot.lane.b32.xlu0 %v936, 4
    %v944 = vpop.permute.xlu0 %943
    %v947 = vsel %vm41, %v31, %v942
    %v948 = vsel %vm41, %v32, %v944
    %949 = vmatprep.subr.mxu0 0.0
    %950 = vmatpush1.msra.mxu0 %v947
    %951 = vmatprep.subr.mxu0 0.0
    %952 = vmatpush1.msra.mxu0 %v948
    %953 = vmatprep.subr.mxu0 0.0
    %954 = vmatpush1.msra.mxu0 0.0
    %955 = vmatprep.subr.mxu0 0.0
    %956 = vmatpush1.msra.mxu0 0.0
    %957 = vmatprep.subr.mxu0 0.0
    %958 = vmatpush1.msra.mxu0 0.0
    %959 = vmatprep.subr.mxu0 0.0
    %960 = vmatpush1.msra.mxu0 0.0
    %961 = vmatprep.subr.mxu0 0.0
    %962 = vmatpush1.msra.mxu0 0.0
    %963 = vmatprep.subr.mxu0 0.0
    %964 = vmatpush1.msra.mxu0 0.0
    %965 = vmatprep.subr.mxu0 0.0
    %966 = vmatpush1.msra.mxu0 0.0
    %967 = vmatprep.subr.mxu0 0.0
    %968 = vmatpush1.msra.mxu0 0.0
    %969 = vmatprep.subr.mxu0 0.0
    %970 = vmatpush1.msra.mxu0 0.0
    %971 = vmatprep.subr.mxu0 0.0
    %972 = vmatpush1.msra.mxu0 0.0
    %973 = vmatprep.subr.mxu0 0.0
    %974 = vmatpush1.msra.mxu0 0.0
    %975 = vmatprep.subr.mxu0 0.0
    %976 = vmatpush1.msra.mxu0 0.0
    %977 = vmatprep.subr.mxu0 0.0
    %978 = vmatpush1.msra.mxu0 0.0
    %979 = vmatprep.subr.mxu0 0.0
    %980 = vmatpush1.msra.mxu0 0.0
    %981 = vmatprep.subr.mxu0 0.0
    %982 = vmatpush1.msra.mxu0 0.0
    %983 = vmatprep.subr.mxu0 0.0
    %984 = vmatpush1.msra.mxu0 0.0
    %985 = vmatprep.subr.mxu0 0.0
    %986 = vmatpush1.msra.mxu0 0.0
    %987 = vmatprep.subr.mxu0 0.0
    %988 = vmatpush1.msra.mxu0 0.0
    %989 = vmatprep.subr.mxu0 0.0
    %990 = vmatpush1.msra.mxu0 0.0
    %991 = vmatprep.subr.mxu0 0.0
    %992 = vmatpush1.msra.mxu0 0.0
    %993 = vmatprep.subr.mxu0 0.0
    %994 = vmatpush1.msra.mxu0 0.0
    %995 = vmatprep.subr.mxu0 0.0
    %996 = vmatpush1.msra.mxu0 0.0
    %997 = vmatprep.subr.mxu0 0.0
    %998 = vmatpush1.msra.mxu0 0.0
    %999 = vmatprep.subr.mxu0 0.0
    %1000 = vmatpush1.msra.mxu0 0.0
    %1001 = vmatprep.subr.mxu0 0.0
    %1002 = vmatpush1.msra.mxu0 0.0
    %1003 = vmatprep.subr.mxu0 0.0
    %1004 = vmatpush1.msra.mxu0 0.0
    %1005 = vmatprep.subr.mxu0 0.0
    %1006 = vmatpush1.msra.mxu0 0.0
    %1007 = vmatprep.subr.mxu0 0.0
    %1008 = vmatpush1.msra.mxu0 0.0
    %1009 = vmatprep.subr.mxu0 0.0
    %1010 = vmatpush1.msra.mxu0 0.0
    %1011 = vmatprep.subr.mxu0 0.0
    %1012 = vmatpush1.msra.mxu0 0.0
    %1013 = vmatprep.mubr.f32.mxu0 0.0
    %1014 = vmatmul.mubr.f32.gmra.mrb[0].mxu0 %v48
    %v1015 = vpop.f32.mrb[0].mxu0
    %v1016 = vadd.f32 0.0, %v1015
    %v1017 = vpop.f32.mrb[0].mxu0
    %1018 = vmatprep.mubr.f32.mxu0 0.0
    %1019 = vmatmul.mubr.f32.gmra.mrb[0].mxu0 %v51
    %v1020 = vpop.f32.mrb[0].mxu0
    %v1021 = vadd.f32 0.0, %v1020
    %v1022 = vpop.f32.mrb[0].mxu0
    %1023 = vdwg.mxu0
    %1024 = vmatprep.subr.mxu0 0.0
    %1025 = vmatpush1.msra.mxu0 %v1016
    %1026 = vmatprep.subr.mxu0 0.0
    %1027 = vmatpush1.msra.mxu0 %v1021
    %1028 = vmatprep.subr.mxu0 0.0
    %1029 = vmatpush1.msra.mxu0 0.0
    %1030 = vmatprep.subr.mxu0 0.0
    %1031 = vmatpush1.msra.mxu0 0.0
    %1032 = vmatprep.subr.mxu0 0.0
    %1033 = vmatpush1.msra.mxu0 0.0
    %1034 = vmatprep.subr.mxu0 0.0
    %1035 = vmatpush1.msra.mxu0 0.0
    %1036 = vmatprep.subr.mxu0 0.0
    %1037 = vmatpush1.msra.mxu0 0.0
    %1038 = vmatprep.subr.mxu0 0.0
    %1039 = vmatpush1.msra.mxu0 0.0
    %1040 = vmatprep.subr.mxu0 0.0
    %1041 = vmatpush1.msra.mxu0 0.0
    %1042 = vmatprep.subr.mxu0 0.0
    %1043 = vmatpush1.msra.mxu0 0.0
    %1044 = vmatprep.subr.mxu0 0.0
    %1045 = vmatpush1.msra.mxu0 0.0
    %1046 = vmatprep.subr.mxu0 0.0
    %1047 = vmatpush1.msra.mxu0 0.0
    %1048 = vmatprep.subr.mxu0 0.0
    %1049 = vmatpush1.msra.mxu0 0.0
    %1050 = vmatprep.subr.mxu0 0.0
    %1051 = vmatpush1.msra.mxu0 0.0
    %1052 = vmatprep.subr.mxu0 0.0
    %1053 = vmatpush1.msra.mxu0 0.0
    %1054 = vmatprep.subr.mxu0 0.0
    %1055 = vmatpush1.msra.mxu0 0.0
    %1056 = vmatprep.subr.mxu0 0.0
    %1057 = vmatpush1.msra.mxu0 0.0
    %1058 = vmatprep.subr.mxu0 0.0
    %1059 = vmatpush1.msra.mxu0 0.0
    %1060 = vmatprep.subr.mxu0 0.0
    %1061 = vmatpush1.msra.mxu0 0.0
    %1062 = vmatprep.subr.mxu0 0.0
    %1063 = vmatpush1.msra.mxu0 0.0
    %1064 = vmatprep.subr.mxu0 0.0
    %1065 = vmatpush1.msra.mxu0 0.0
    %1066 = vmatprep.subr.mxu0 0.0
    %1067 = vmatpush1.msra.mxu0 0.0
    %1068 = vmatprep.subr.mxu0 0.0
    %1069 = vmatpush1.msra.mxu0 0.0
    %1070 = vmatprep.subr.mxu0 0.0
    %1071 = vmatpush1.msra.mxu0 0.0
    %1072 = vmatprep.subr.mxu0 0.0
    %1073 = vmatpush1.msra.mxu0 0.0
    %1074 = vmatprep.subr.mxu0 0.0
    %1075 = vmatpush1.msra.mxu0 0.0
    %1076 = vmatprep.subr.mxu0 0.0
    %1077 = vmatpush1.msra.mxu0 0.0
    %1078 = vmatprep.subr.mxu0 0.0
    %1079 = vmatpush1.msra.mxu0 0.0
    %1080 = vmatprep.subr.mxu0 0.0
    %1081 = vmatpush1.msra.mxu0 0.0
    %1082 = vmatprep.subr.mxu0 0.0
    %1083 = vmatpush1.msra.mxu0 0.0
    %1084 = vmatprep.subr.mxu0 0.0
    %1085 = vmatpush1.msra.mxu0 0.0
    %1086 = vmatprep.subr.mxu0 0.0
    %1087 = vmatpush1.msra.mxu0 0.0
    %1088 = vmatprep.mubr.f32.mxu0 0.0
    %1089 = vmatmul.mubr.f32.gmra.mrb[0].mxu0 %v48
    %v1090 = vpop.f32.mrb[0].mxu0
    %v1091 = vadd.f32 0.0, %v1090
    %v1092 = vpop.f32.mrb[0].mxu0
    %1093 = vmatprep.mubr.f32.mxu0 0.0
    %1094 = vmatmul.mubr.f32.gmra.mrb[0].mxu0 %v51
    %v1095 = vpop.f32.mrb[0].mxu0
    %v1096 = vadd.f32 0.0, %v1095
    %v1097 = vpop.f32.mrb[0].mxu0
    %1098 = vdwg.mxu0
    %1099 = vmatprep.subr.mxu0 0.0
    %1100 = vmatpush1.msra.mxu0 %v947
    %1101 = vmatprep.subr.mxu0 0.0
    %1102 = vmatpush1.msra.mxu0 %v948
    %1103 = vmatprep.subr.mxu0 0.0
    %1104 = vmatpush1.msra.mxu0 0.0
    %1105 = vmatprep.subr.mxu0 0.0
    %1106 = vmatpush1.msra.mxu0 0.0
    %1107 = vmatprep.subr.mxu0 0.0
    %1108 = vmatpush1.msra.mxu0 0.0
    %1109 = vmatprep.subr.mxu0 0.0
    %1110 = vmatpush1.msra.mxu0 0.0
    %1111 = vmatprep.subr.mxu0 0.0
    %1112 = vmatpush1.msra.mxu0 0.0
    %1113 = vmatprep.subr.mxu0 0.0
    %1114 = vmatpush1.msra.mxu0 0.0
    %1115 = vmatprep.subr.mxu0 0.0
    %1116 = vmatpush1.msra.mxu0 0.0
    %1117 = vmatprep.subr.mxu0 0.0
    %1118 = vmatpush1.msra.mxu0 0.0
    %1119 = vmatprep.subr.mxu0 0.0
    %1120 = vmatpush1.msra.mxu0 0.0
    %1121 = vmatprep.subr.mxu0 0.0
    %1122 = vmatpush1.msra.mxu0 0.0
    %1123 = vmatprep.subr.mxu0 0.0
    %1124 = vmatpush1.msra.mxu0 0.0
    %1125 = vmatprep.subr.mxu0 0.0
    %1126 = vmatpush1.msra.mxu0 0.0
    %1127 = vmatprep.subr.mxu0 0.0
    %1128 = vmatpush1.msra.mxu0 0.0
    %1129 = vmatprep.subr.mxu0 0.0
    %1130 = vmatpush1.msra.mxu0 0.0
    %1131 = vmatprep.subr.mxu0 0.0
    %1132 = vmatpush1.msra.mxu0 0.0
    %1133 = vmatprep.subr.mxu0 0.0
    %1134 = vmatpush1.msra.mxu0 0.0
    %1135 = vmatprep.subr.mxu0 0.0
    %1136 = vmatpush1.msra.mxu0 0.0
    %1137 = vmatprep.subr.mxu0 0.0
    %1138 = vmatpush1.msra.mxu0 0.0
    %1139 = vmatprep.subr.mxu0 0.0
    %1140 = vmatpush1.msra.mxu0 0.0
    %1141 = vmatprep.subr.mxu0 0.0
    %1142 = vmatpush1.msra.mxu0 0.0
    %1143 = vmatprep.subr.mxu0 0.0
    %1144 = vmatpush1.msra.mxu0 0.0
    %1145 = vmatprep.subr.mxu0 0.0
    %1146 = vmatpush1.msra.mxu0 0.0
    %1147 = vmatprep.subr.mxu0 0.0
    %1148 = vmatpush1.msra.mxu0 0.0
    %1149 = vmatprep.subr.mxu0 0.0
    %1150 = vmatpush1.msra.mxu0 0.0
    %1151 = vmatprep.subr.mxu0 0.0
    %1152 = vmatpush1.msra.mxu0 0.0
    %1153 = vmatprep.subr.mxu0 0.0
    %1154 = vmatpush1.msra.mxu0 0.0
    %1155 = vmatprep.subr.mxu0 0.0
    %1156 = vmatpush1.msra.mxu0 0.0
    %1157 = vmatprep.subr.mxu0 0.0
    %1158 = vmatpush1.msra.mxu0 0.0
    %1159 = vmatprep.subr.mxu0 0.0
    %1160 = vmatpush1.msra.mxu0 0.0
    %1161 = vmatprep.subr.mxu0 0.0
    %1162 = vmatpush1.msra.mxu0 0.0
    %1163 = vmatprep.mubr.f32.mxu0 0.0
    %1164 = vmatmul.mubr.f32.gmra.mrb[0].mxu0 %v207
    %v1165 = vpop.f32.mrb[0].mxu0
    %v1166 = vadd.f32 0.0, %v1165
    %v1167 = vpop.f32.mrb[0].mxu0
    %1168 = vmatprep.mubr.f32.mxu0 0.0
    %1169 = vmatmul.mubr.f32.gmra.mrb[0].mxu0 %v210
    %v1170 = vpop.f32.mrb[0].mxu0
    %v1171 = vadd.f32 0.0, %v1170
    %v1172 = vpop.f32.mrb[0].mxu0
    %1173 = vdwg.mxu0
    %1174 = vmatprep.subr.mxu0 0.0
    %1175 = vmatpush1.msra.mxu0 %v1166
    %1176 = vmatprep.subr.mxu0 0.0
    %1177 = vmatpush1.msra.mxu0 %v1171
    %1178 = vmatprep.subr.mxu0 0.0
    %1179 = vmatpush1.msra.mxu0 0.0
    %1180 = vmatprep.subr.mxu0 0.0
    %1181 = vmatpush1.msra.mxu0 0.0
    %1182 = vmatprep.subr.mxu0 0.0
    %1183 = vmatpush1.msra.mxu0 0.0
    %1184 = vmatprep.subr.mxu0 0.0
    %1185 = vmatpush1.msra.mxu0 0.0
    %1186 = vmatprep.subr.mxu0 0.0
    %1187 = vmatpush1.msra.mxu0 0.0
    %1188 = vmatprep.subr.mxu0 0.0
    %1189 = vmatpush1.msra.mxu0 0.0
    %1190 = vmatprep.subr.mxu0 0.0
    %1191 = vmatpush1.msra.mxu0 0.0
    %1192 = vmatprep.subr.mxu0 0.0
    %1193 = vmatpush1.msra.mxu0 0.0
    %1194 = vmatprep.subr.mxu0 0.0
    %1195 = vmatpush1.msra.mxu0 0.0
    %1196 = vmatprep.subr.mxu0 0.0
    %1197 = vmatpush1.msra.mxu0 0.0
    %1198 = vmatprep.subr.mxu0 0.0
    %1199 = vmatpush1.msra.mxu0 0.0
    %1200 = vmatprep.subr.mxu0 0.0
    %1201 = vmatpush1.msra.mxu0 0.0
    %1202 = vmatprep.subr.mxu0 0.0
    %1203 = vmatpush1.msra.mxu0 0.0
    %1204 = vmatprep.subr.mxu0 0.0
    %1205 = vmatpush1.msra.mxu0 0.0
    %1206 = vmatprep.subr.mxu0 0.0
    %1207 = vmatpush1.msra.mxu0 0.0
    %1208 = vmatprep.subr.mxu0 0.0
    %1209 = vmatpush1.msra.mxu0 0.0
    %1210 = vmatprep.subr.mxu0 0.0
    %1211 = vmatpush1.msra.mxu0 0.0
    %1212 = vmatprep.subr.mxu0 0.0
    %1213 = vmatpush1.msra.mxu0 0.0
    %1214 = vmatprep.subr.mxu0 0.0
    %1215 = vmatpush1.msra.mxu0 0.0
    %1216 = vmatprep.subr.mxu0 0.0
    %1217 = vmatpush1.msra.mxu0 0.0
    %1218 = vmatprep.subr.mxu0 0.0
    %1219 = vmatpush1.msra.mxu0 0.0
    %1220 = vmatprep.subr.mxu0 0.0
    %1221 = vmatpush1.msra.mxu0 0.0
    %1222 = vmatprep.subr.mxu0 0.0
    %1223 = vmatpush1.msra.mxu0 0.0
    %1224 = vmatprep.subr.mxu0 0.0
    %1225 = vmatpush1.msra.mxu0 0.0
    %1226 = vmatprep.subr.mxu0 0.0
    %1227 = vmatpush1.msra.mxu0 0.0
    %1228 = vmatprep.subr.mxu0 0.0
    %1229 = vmatpush1.msra.mxu0 0.0
    %1230 = vmatprep.subr.mxu0 0.0
    %1231 = vmatpush1.msra.mxu0 0.0
    %1232 = vmatprep.subr.mxu0 0.0
    %1233 = vmatpush1.msra.mxu0 0.0
    %1234 = vmatprep.subr.mxu0 0.0
    %1235 = vmatpush1.msra.mxu0 0.0
    %1236 = vmatprep.subr.mxu0 0.0
    %1237 = vmatpush1.msra.mxu0 0.0
    %1238 = vmatprep.mubr.f32.mxu0 0.0
    %1239 = vmatmul.mubr.f32.gmra.mrb[0].mxu0 %v207
    %v1240 = vpop.f32.mrb[0].mxu0
    %v1241 = vadd.f32 0.0, %v1240
    %v1242 = vpop.f32.mrb[0].mxu0
    %1243 = vmatprep.mubr.f32.mxu0 0.0
    %1244 = vmatmul.mubr.f32.gmra.mrb[0].mxu0 %v210
    %v1245 = vpop.f32.mrb[0].mxu0
    %v1246 = vadd.f32 0.0, %v1245
    %v1247 = vpop.f32.mrb[0].mxu0
    %1248 = vdwg.mxu0
    %1251 = vrot.lane.b32.xlu0 %v1016, 36
    %v1252 = vpop.permute.xlu0 %1251
    %1253 = vrot.lane.b32.xlu0 %v1021, 36
    %v1254 = vpop.permute.xlu0 %1253
    %1259 = vrot.lane.b32.xlu0 %v1091, 72
    %v1260 = vpop.permute.xlu0 %1259
    %1261 = vrot.lane.b32.xlu0 %v1096, 72
    %v1262 = vpop.permute.xlu0 %1261
    %1267 = vrot.lane.b32.xlu0 %v1166, 108
    %v1268 = vpop.permute.xlu0 %1267
    %1269 = vrot.lane.b32.xlu0 %v1171, 108
    %v1270 = vpop.permute.xlu0 %1269
    %1275 = vrot.lane.b32.xlu0 %v1241, 16
    %v1276 = vpop.permute.xlu0 %1275
    %1277 = vrot.lane.b32.xlu0 %v1246, 16
    %v1278 = vpop.permute.xlu0 %1277
    %v1281 = vsel %vm394, %v947, %v1252
    %v1282 = vsel %vm394, %v948, %v1254
    %v1283 = vsel %vm397, %v1281, %v1260
    %v1284 = vsel %vm397, %v1282, %v1262
    %v1285 = vsel %vm400, %v1283, %v1268
    %v1286 = vsel %vm400, %v1284, %v1270
    %v1287 = vsel %vm46, %v1268, %v1276
    %v1288 = vsel %vm46, %v1270, %v1278
    %1291 = vrot.lane.b32.xlu0 %v937, 4
    %v1292 = vpop.permute.xlu0 %1291
    %1293 = vrot.lane.b32.xlu0 %v938, 4
    %v1294 = vpop.permute.xlu0 %1293
    %v1297 = vsel %vm41, %v406, %v1292
    %v1298 = vsel %vm41, %v407, %v1294
    %1299 = vmatprep.subr.mxu0 0.0
    %1300 = vmatpush1.msra.mxu0 %v1297
    %1301 = vmatprep.subr.mxu0 0.0
    %1302 = vmatpush1.msra.mxu0 %v1298
    %1303 = vmatprep.subr.mxu0 0.0
    %1304 = vmatpush1.msra.mxu0 0.0
    %1305 = vmatprep.subr.mxu0 0.0
    %1306 = vmatpush1.msra.mxu0 0.0
    %1307 = vmatprep.subr.mxu0 0.0
    %1308 = vmatpush1.msra.mxu0 0.0
    %1309 = vmatprep.subr.mxu0 0.0
    %1310 = vmatpush1.msra.mxu0 0.0
    %1311 = vmatprep.subr.mxu0 0.0
    %1312 = vmatpush1.msra.mxu0 0.0
    %1313 = vmatprep.subr.mxu0 0.0
    %1314 = vmatpush1.msra.mxu0 0.0
    %1315 = vmatprep.subr.mxu0 0.0
    %1316 = vmatpush1.msra.mxu0 0.0
    %1317 = vmatprep.subr.mxu0 0.0
    %1318 = vmatpush1.msra.mxu0 0.0
    %1319 = vmatprep.subr.mxu0 0.0
    %1320 = vmatpush1.msra.mxu0 0.0
    %1321 = vmatprep.subr.mxu0 0.0
    %1322 = vmatpush1.msra.mxu0 0.0
    %1323 = vmatprep.subr.mxu0 0.0
    %1324 = vmatpush1.msra.mxu0 0.0
    %1325 = vmatprep.subr.mxu0 0.0
    %1326 = vmatpush1.msra.mxu0 0.0
    %1327 = vmatprep.subr.mxu0 0.0
    %1328 = vmatpush1.msra.mxu0 0.0
    %1329 = vmatprep.subr.mxu0 0.0
    %1330 = vmatpush1.msra.mxu0 0.0
    %1331 = vmatprep.subr.mxu0 0.0
    %1332 = vmatpush1.msra.mxu0 0.0
    %1333 = vmatprep.subr.mxu0 0.0
    %1334 = vmatpush1.msra.mxu0 0.0
    %1335 = vmatprep.subr.mxu0 0.0
    %1336 = vmatpush1.msra.mxu0 0.0
    %1337 = vmatprep.subr.mxu0 0.0
    %1338 = vmatpush1.msra.mxu0 0.0
    %1339 = vmatprep.subr.mxu0 0.0
    %1340 = vmatpush1.msra.mxu0 0.0
    %1341 = vmatprep.subr.mxu0 0.0
    %1342 = vmatpush1.msra.mxu0 0.0
    %1343 = vmatprep.subr.mxu0 0.0
    %1344 = vmatpush1.msra.mxu0 0.0
    %1345 = vmatprep.subr.mxu0 0.0
    %1346 = vmatpush1.msra.mxu0 0.0
    %1347 = vmatprep.subr.mxu0 0.0
    %1348 = vmatpush1.msra.mxu0 0.0
    %1349 = vmatprep.subr.mxu0 0.0
    %1350 = vmatpush1.msra.mxu0 0.0
    %1351 = vmatprep.subr.mxu0 0.0
    %1352 = vmatpush1.msra.mxu0 0.0
    %1353 = vmatprep.subr.mxu0 0.0
    %1354 = vmatpush1.msra.mxu0 0.0
    %1355 = vmatprep.subr.mxu0 0.0
    %1356 = vmatpush1.msra.mxu0 0.0
    %1357 = vmatprep.subr.mxu0 0.0
    %1358 = vmatpush1.msra.mxu0 0.0
    %1359 = vmatprep.subr.mxu0 0.0
    %1360 = vmatpush1.msra.mxu0 0.0
    %1361 = vmatprep.subr.mxu0 0.0
    %1362 = vmatpush1.msra.mxu0 0.0
    %1363 = vmatprep.mubr.f32.mxu0 0.0
    %1364 = vmatmul.mubr.f32.gmra.mrb[0].mxu0 %v425
    %v1365 = vpop.f32.mrb[0].mxu0
    %v1366 = vadd.f32 0.0, %v1365
    %v1367 = vpop.f32.mrb[0].mxu0
    %1368 = vmatprep.mubr.f32.mxu0 0.0
    %1369 = vmatmul.mubr.f32.gmra.mrb[0].mxu0 %v428
    %v1370 = vpop.f32.mrb[0].mxu0
    %v1371 = vadd.f32 0.0, %v1370
    %v1372 = vpop.f32.mrb[0].mxu0
    %1373 = vdwg.mxu0
    %1374 = vmatprep.subr.mxu0 0.0
    %1375 = vmatpush1.msra.mxu0 %v1366
    %1376 = vmatprep.subr.mxu0 0.0
    %1377 = vmatpush1.msra.mxu0 %v1371
    %1378 = vmatprep.subr.mxu0 0.0
    %1379 = vmatpush1.msra.mxu0 0.0
    %1380 = vmatprep.subr.mxu0 0.0
    %1381 = vmatpush1.msra.mxu0 0.0
    %1382 = vmatprep.subr.mxu0 0.0
    %1383 = vmatpush1.msra.mxu0 0.0
    %1384 = vmatprep.subr.mxu0 0.0
    %1385 = vmatpush1.msra.mxu0 0.0
    %1386 = vmatprep.subr.mxu0 0.0
    %1387 = vmatpush1.msra.mxu0 0.0
    %1388 = vmatprep.subr.mxu0 0.0
    %1389 = vmatpush1.msra.mxu0 0.0
    %1390 = vmatprep.subr.mxu0 0.0
    %1391 = vmatpush1.msra.mxu0 0.0
    %1392 = vmatprep.subr.mxu0 0.0
    %1393 = vmatpush1.msra.mxu0 0.0
    %1394 = vmatprep.subr.mxu0 0.0
    %1395 = vmatpush1.msra.mxu0 0.0
    %1396 = vmatprep.subr.mxu0 0.0
    %1397 = vmatpush1.msra.mxu0 0.0
    %1398 = vmatprep.subr.mxu0 0.0
    %1399 = vmatpush1.msra.mxu0 0.0
    %1400 = vmatprep.subr.mxu0 0.0
    %1401 = vmatpush1.msra.mxu0 0.0
    %1402 = vmatprep.subr.mxu0 0.0
    %1403 = vmatpush1.msra.mxu0 0.0
    %1404 = vmatprep.subr.mxu0 0.0
    %1405 = vmatpush1.msra.mxu0 0.0
    %1406 = vmatprep.subr.mxu0 0.0
    %1407 = vmatpush1.msra.mxu0 0.0
    %1408 = vmatprep.subr.mxu0 0.0
    %1409 = vmatpush1.msra.mxu0 0.0
    %1410 = vmatprep.subr.mxu0 0.0
    %1411 = vmatpush1.msra.mxu0 0.0
    %1412 = vmatprep.subr.mxu0 0.0
    %1413 = vmatpush1.msra.mxu0 0.0
    %1414 = vmatprep.subr.mxu0 0.0
    %1415 = vmatpush1.msra.mxu0 0.0
    %1416 = vmatprep.subr.mxu0 0.0
    %1417 = vmatpush1.msra.mxu0 0.0
    %1418 = vmatprep.subr.mxu0 0.0
    %1419 = vmatpush1.msra.mxu0 0.0
    %1420 = vmatprep.subr.mxu0 0.0
    %1421 = vmatpush1.msra.mxu0 0.0
    %1422 = vmatprep.subr.mxu0 0.0
    %1423 = vmatpush1.msra.mxu0 0.0
    %1424 = vmatprep.subr.mxu0 0.0
    %1425 = vmatpush1.msra.mxu0 0.0
    %1426 = vmatprep.subr.mxu0 0.0
    %1427 = vmatpush1.msra.mxu0 0.0
    %1428 = vmatprep.subr.mxu0 0.0
    %1429 = vmatpush1.msra.mxu0 0.0
    %1430 = vmatprep.subr.mxu0 0.0
    %1431 = vmatpush1.msra.mxu0 0.0
    %1432 = vmatprep.subr.mxu0 0.0
    %1433 = vmatpush1.msra.mxu0 0.0
    %1434 = vmatprep.subr.mxu0 0.0
    %1435 = vmatpush1.msra.mxu0 0.0
    %1436 = vmatprep.subr.mxu0 0.0
    %1437 = vmatpush1.msra.mxu0 0.0
    %1438 = vmatprep.mubr.f32.mxu0 0.0
    %1439 = vmatmul.mubr.f32.gmra.mrb[0].mxu0 %v425
    %v1440 = vpop.f32.mrb[0].mxu0
    %v1441 = vadd.f32 0.0, %v1440
    %v1442 = vpop.f32.mrb[0].mxu0
    %1443 = vmatprep.mubr.f32.mxu0 0.0
    %1444 = vmatmul.mubr.f32.gmra.mrb[0].mxu0 %v428
    %v1445 = vpop.f32.mrb[0].mxu0
    %v1446 = vadd.f32 0.0, %v1445
    %v1447 = vpop.f32.mrb[0].mxu0
    %1448 = vdwg.mxu0
    %1449 = vmatprep.subr.mxu0 0.0
    %1450 = vmatpush1.msra.mxu0 %v1297
    %1451 = vmatprep.subr.mxu0 0.0
    %1452 = vmatpush1.msra.mxu0 %v1298
    %1453 = vmatprep.subr.mxu0 0.0
    %1454 = vmatpush1.msra.mxu0 0.0
    %1455 = vmatprep.subr.mxu0 0.0
    %1456 = vmatpush1.msra.mxu0 0.0
    %1457 = vmatprep.subr.mxu0 0.0
    %1458 = vmatpush1.msra.mxu0 0.0
    %1459 = vmatprep.subr.mxu0 0.0
    %1460 = vmatpush1.msra.mxu0 0.0
    %1461 = vmatprep.subr.mxu0 0.0
    %1462 = vmatpush1.msra.mxu0 0.0
    %1463 = vmatprep.subr.mxu0 0.0
    %1464 = vmatpush1.msra.mxu0 0.0
    %1465 = vmatprep.subr.mxu0 0.0
    %1466 = vmatpush1.msra.mxu0 0.0
    %1467 = vmatprep.subr.mxu0 0.0
    %1468 = vmatpush1.msra.mxu0 0.0
    %1469 = vmatprep.subr.mxu0 0.0
    %1470 = vmatpush1.msra.mxu0 0.0
    %1471 = vmatprep.subr.mxu0 0.0
    %1472 = vmatpush1.msra.mxu0 0.0
    %1473 = vmatprep.subr.mxu0 0.0
    %1474 = vmatpush1.msra.mxu0 0.0
    %1475 = vmatprep.subr.mxu0 0.0
    %1476 = vmatpush1.msra.mxu0 0.0
    %1477 = vmatprep.subr.mxu0 0.0
    %1478 = vmatpush1.msra.mxu0 0.0
    %1479 = vmatprep.subr.mxu0 0.0
    %1480 = vmatpush1.msra.mxu0 0.0
    %1481 = vmatprep.subr.mxu0 0.0
    %1482 = vmatpush1.msra.mxu0 0.0
    %1483 = vmatprep.subr.mxu0 0.0
    %1484 = vmatpush1.msra.mxu0 0.0
    %1485 = vmatprep.subr.mxu0 0.0
    %1486 = vmatpush1.msra.mxu0 0.0
    %1487 = vmatprep.subr.mxu0 0.0
    %1488 = vmatpush1.msra.mxu0 0.0
    %1489 = vmatprep.subr.mxu0 0.0
    %1490 = vmatpush1.msra.mxu0 0.0
    %1491 = vmatprep.subr.mxu0 0.0
    %1492 = vmatpush1.msra.mxu0 0.0
    %1493 = vmatprep.subr.mxu0 0.0
    %1494 = vmatpush1.msra.mxu0 0.0
    %1495 = vmatprep.subr.mxu0 0.0
    %1496 = vmatpush1.msra.mxu0 0.0
    %1497 = vmatprep.subr.mxu0 0.0
    %1498 = vmatpush1.msra.mxu0 0.0
    %1499 = vmatprep.subr.mxu0 0.0
    %1500 = vmatpush1.msra.mxu0 0.0
    %1501 = vmatprep.subr.mxu0 0.0
    %1502 = vmatpush1.msra.mxu0 0.0
    %1503 = vmatprep.subr.mxu0 0.0
    %1504 = vmatpush1.msra.mxu0 0.0
    %1505 = vmatprep.subr.mxu0 0.0
    %1506 = vmatpush1.msra.mxu0 0.0
    %1507 = vmatprep.subr.mxu0 0.0
    %1508 = vmatpush1.msra.mxu0 0.0
    %1509 = vmatprep.subr.mxu0 0.0
    %1510 = vmatpush1.msra.mxu0 0.0
    %1511 = vmatprep.subr.mxu0 0.0
    %1512 = vmatpush1.msra.mxu0 0.0
    %1513 = vmatprep.mubr.f32.mxu0 0.0
    %1514 = vmatmul.mubr.f32.gmra.mrb[0].mxu0 %v584
    %v1515 = vpop.f32.mrb[0].mxu0
    %v1516 = vadd.f32 0.0, %v1515
    %v1517 = vpop.f32.mrb[0].mxu0
    %1518 = vmatprep.mubr.f32.mxu0 0.0
    %1519 = vmatmul.mubr.f32.gmra.mrb[0].mxu0 %v587
    %v1520 = vpop.f32.mrb[0].mxu0
    %v1521 = vadd.f32 0.0, %v1520
    %v1522 = vpop.f32.mrb[0].mxu0
    %1523 = vdwg.mxu0
    %1524 = vmatprep.subr.mxu0 0.0
    %1525 = vmatpush1.msra.mxu0 %v1516
    %1526 = vmatprep.subr.mxu0 0.0
    %1527 = vmatpush1.msra.mxu0 %v1521
    %1528 = vmatprep.subr.mxu0 0.0
    %1529 = vmatpush1.msra.mxu0 0.0
    %1530 = vmatprep.subr.mxu0 0.0
    %1531 = vmatpush1.msra.mxu0 0.0
    %1532 = vmatprep.subr.mxu0 0.0
    %1533 = vmatpush1.msra.mxu0 0.0
    %1534 = vmatprep.subr.mxu0 0.0
    %1535 = vmatpush1.msra.mxu0 0.0
    %1536 = vmatprep.subr.mxu0 0.0
    %1537 = vmatpush1.msra.mxu0 0.0
    %1538 = vmatprep.subr.mxu0 0.0
    %1539 = vmatpush1.msra.mxu0 0.0
    %1540 = vmatprep.subr.mxu0 0.0
    %1541 = vmatpush1.msra.mxu0 0.0
    %1542 = vmatprep.subr.mxu0 0.0
    %1543 = vmatpush1.msra.mxu0 0.0
    %1544 = vmatprep.subr.mxu0 0.0
    %1545 = vmatpush1.msra.mxu0 0.0
    %1546 = vmatprep.subr.mxu0 0.0
    %1547 = vmatpush1.msra.mxu0 0.0
    %1548 = vmatprep.subr.mxu0 0.0
    %1549 = vmatpush1.msra.mxu0 0.0
    %1550 = vmatprep.subr.mxu0 0.0
    %1551 = vmatpush1.msra.mxu0 0.0
    %1552 = vmatprep.subr.mxu0 0.0
    %1553 = vmatpush1.msra.mxu0 0.0
    %1554 = vmatprep.subr.mxu0 0.0
    %1555 = vmatpush1.msra.mxu0 0.0
    %1556 = vmatprep.subr.mxu0 0.0
    %1557 = vmatpush1.msra.mxu0 0.0
    %1558 = vmatprep.subr.mxu0 0.0
    %1559 = vmatpush1.msra.mxu0 0.0
    %1560 = vmatprep.subr.mxu0 0.0
    %1561 = vmatpush1.msra.mxu0 0.0
    %1562 = vmatprep.subr.mxu0 0.0
    %1563 = vmatpush1.msra.mxu0 0.0
    %1564 = vmatprep.subr.mxu0 0.0
    %1565 = vmatpush1.msra.mxu0 0.0
    %1566 = vmatprep.subr.mxu0 0.0
    %1567 = vmatpush1.msra.mxu0 0.0
    %1568 = vmatprep.subr.mxu0 0.0
    %1569 = vmatpush1.msra.mxu0 0.0
    %1570 = vmatprep.subr.mxu0 0.0
    %1571 = vmatpush1.msra.mxu0 0.0
    %1572 = vmatprep.subr.mxu0 0.0
    %1573 = vmatpush1.msra.mxu0 0.0
    %1574 = vmatprep.subr.mxu0 0.0
    %1575 = vmatpush1.msra.mxu0 0.0
    %1576 = vmatprep.subr.mxu0 0.0
    %1577 = vmatpush1.msra.mxu0 0.0
    %1578 = vmatprep.subr.mxu0 0.0
    %1579 = vmatpush1.msra.mxu0 0.0
    %1580 = vmatprep.subr.mxu0 0.0
    %1581 = vmatpush1.msra.mxu0 0.0
    %1582 = vmatprep.subr.mxu0 0.0
    %1583 = vmatpush1.msra.mxu0 0.0
    %1584 = vmatprep.subr.mxu0 0.0
    %1585 = vmatpush1.msra.mxu0 0.0
    %1586 = vmatprep.subr.mxu0 0.0
    %1587 = vmatpush1.msra.mxu0 0.0
    %1588 = vmatprep.mubr.f32.mxu0 0.0
    %1589 = vmatmul.mubr.f32.gmra.mrb[0].mxu0 %v584
    %v1590 = vpop.f32.mrb[0].mxu0
    %v1591 = vadd.f32 0.0, %v1590
    %v1592 = vpop.f32.mrb[0].mxu0
    %1593 = vmatprep.mubr.f32.mxu0 0.0
    %1594 = vmatmul.mubr.f32.gmra.mrb[0].mxu0 %v587
    %v1595 = vpop.f32.mrb[0].mxu0
    %v1596 = vadd.f32 0.0, %v1595
    %v1597 = vpop.f32.mrb[0].mxu0
    %1598 = vdwg.mxu0
    %1601 = vrot.lane.b32.xlu0 %v1366, 36
    %v1602 = vpop.permute.xlu0 %1601
    %1603 = vrot.lane.b32.xlu0 %v1371, 36
    %v1604 = vpop.permute.xlu0 %1603
    %1609 = vrot.lane.b32.xlu0 %v1441, 72
    %v1610 = vpop.permute.xlu0 %1609
    %1611 = vrot.lane.b32.xlu0 %v1446, 72
    %v1612 = vpop.permute.xlu0 %1611
    %1617 = vrot.lane.b32.xlu0 %v1516, 108
    %v1618 = vpop.permute.xlu0 %1617
    %1619 = vrot.lane.b32.xlu0 %v1521, 108
    %v1620 = vpop.permute.xlu0 %1619
    %1625 = vrot.lane.b32.xlu0 %v1591, 16
    %v1626 = vpop.permute.xlu0 %1625
    %1627 = vrot.lane.b32.xlu0 %v1596, 16
    %v1628 = vpop.permute.xlu0 %1627
    %v1631 = vsel %vm394, %v1297, %v1602
    %v1632 = vsel %vm394, %v1298, %v1604
    %v1633 = vsel %vm397, %v1631, %v1610
    %v1634 = vsel %vm397, %v1632, %v1612
    %v1635 = vsel %vm400, %v1633, %v1618
    %v1636 = vsel %vm400, %v1634, %v1620
    %v1637 = vsel %vm46, %v1618, %v1626
    %v1638 = vsel %vm46, %v1620, %v1628
    %v1639 = vld [vmem:[%s5] sm:$0xff]
    %v1640 = vld [vmem:[%s5 + $0x8] sm:$0xff]
    %v1641 = vld [vmem:[%s5 + $0x10] sm:$0xff]
    %v1642 = vld [vmem:[%s5 + $0x18] sm:$0xff]
    %v1643 = vld [vmem:[%s5 + $0x20] sm:$0xff]
    %v1644 = vld [vmem:[%s5 + $0x28] sm:$0xff]
    %v1645 = vld [vmem:[%s5 + $0x30] sm:$0xff]
    %v1646 = vld [vmem:[%s5 + $0x38] sm:$0xff]
    %v1647 = vld [vmem:[%s5 + $0x40] sm:$0xff]
    %v1648 = vld [vmem:[%s5 + $0x48] sm:$0xff]
    %v1649 = vld [vmem:[%s5 + $0x50] sm:$0xff]
    %v1650 = vld [vmem:[%s5 + $0x58] sm:$0xff]
    %v1651 = vld [vmem:[%s5 + $0x60] sm:$0xff]
    %v1652 = vld [vmem:[%s5 + $0x68] sm:$0xff]
    %v1653 = vld [vmem:[%s5 + $0x70] sm:$0xff]
    %v1654 = vld [vmem:[%s5 + $0x78] sm:$0xff]
    %v1655 = vld [vmem:[%s5 + $0x80] sm:$0xff]
    %v1656 = vld [vmem:[%s5 + $0x88] sm:$0xff]
    %v1657 = vld [vmem:[%s5 + $0x90] sm:$0xff]
    %v1658 = vld [vmem:[%s5 + $0x98] sm:$0xff]
    %v1659 = vld [vmem:[%s5 + $0xa0] sm:$0xff]
    %v1660 = vld [vmem:[%s5 + $0xa8] sm:$0xff]
    %v1661 = vld [vmem:[%s5 + $0xb0] sm:$0xf]
    %v1662 = vld [vmem:[%s6] sm:$0x1]
    %v1664 = vlaneseq
    %v1665 = vshrl.u32 %v1664, 7
    %v1666 = vsub.s32 0, %v1665
    %v1667 = vrot.slane %v1662, %v1666
    %v1670 = vsel %vm809, %v1287, 0
    %v1673 = vsel %vm809, %v1288, 0
    %v1676 = vsel %vm809, %v1637, 0
    %v1679 = vsel %vm809, %v1638, 0
    %v1682 = vsel %vm822, %v1661, 0
    %1684 = vmatprep.subr.mxu0 0.0
    %1685 = vmatpush1.msra.mxu0 %v1639
    %1686 = vmatprep.subr.mxu0 0.0
    %1687 = vmatpush1.msra.mxu0 %v1640
    %1688 = vmatprep.subr.mxu0 0.0
    %1689 = vmatpush1.msra.mxu0 %v1641
    %1690 = vmatprep.subr.mxu0 0.0
    %1691 = vmatpush1.msra.mxu0 %v1642
    %1692 = vmatprep.subr.mxu0 0.0
    %1693 = vmatpush1.msra.mxu0 %v1643
    %1694 = vmatprep.subr.mxu0 0.0
    %1695 = vmatpush1.msra.mxu0 %v1644
    %1696 = vmatprep.subr.mxu0 0.0
    %1697 = vmatpush1.msra.mxu0 %v1645
    %1698 = vmatprep.subr.mxu0 0.0
    %1699 = vmatpush1.msra.mxu0 %v1646
    %1700 = vmatprep.subr.mxu0 0.0
    %1701 = vmatpush1.msra.mxu0 %v1647
    %1702 = vmatprep.subr.mxu0 0.0
    %1703 = vmatpush1.msra.mxu0 %v1648
    %1704 = vmatprep.subr.mxu0 0.0
    %1705 = vmatpush1.msra.mxu0 %v1649
    %1706 = vmatprep.subr.mxu0 0.0
    %1707 = vmatpush1.msra.mxu0 %v1650
    %1708 = vmatprep.subr.mxu0 0.0
    %1709 = vmatpush1.msra.mxu0 %v1651
    %1710 = vmatprep.subr.mxu0 0.0
    %1711 = vmatpush1.msra.mxu0 %v1652
    %1712 = vmatprep.subr.mxu0 0.0
    %1713 = vmatpush1.msra.mxu0 %v1653
    %1714 = vmatprep.subr.mxu0 0.0
    %1715 = vmatpush1.msra.mxu0 %v1654
    %1716 = vmatprep.subr.mxu0 0.0
    %1717 = vmatpush1.msra.mxu0 %v1655
    %1718 = vmatprep.subr.mxu0 0.0
    %1719 = vmatpush1.msra.mxu0 %v1656
    %1720 = vmatprep.subr.mxu0 0.0
    %1721 = vmatpush1.msra.mxu0 %v1657
    %1722 = vmatprep.subr.mxu0 0.0
    %1723 = vmatpush1.msra.mxu0 %v1658
    %1724 = vmatprep.subr.mxu0 0.0
    %1725 = vmatpush1.msra.mxu0 %v1659
    %1726 = vmatprep.subr.mxu0 0.0
    %1727 = vmatpush1.msra.mxu0 %v1660
    %1728 = vmatprep.subr.mxu0 0.0
    %1729 = vmatpush1.msra.mxu0 %v1682
    %1730 = vmatprep.subr.mxu0 0.0
    %1731 = vmatpush1.msra.mxu0 0.0
    %1732 = vmatprep.subr.mxu0 0.0
    %1733 = vmatpush1.msra.mxu0 0.0
    %1734 = vmatprep.subr.mxu0 0.0
    %1735 = vmatpush1.msra.mxu0 0.0
    %1736 = vmatprep.subr.mxu0 0.0
    %1737 = vmatpush1.msra.mxu0 0.0
    %1738 = vmatprep.subr.mxu0 0.0
    %1739 = vmatpush1.msra.mxu0 0.0
    %1740 = vmatprep.subr.mxu0 0.0
    %1741 = vmatpush1.msra.mxu0 0.0
    %1742 = vmatprep.subr.mxu0 0.0
    %1743 = vmatpush1.msra.mxu0 0.0
    %1744 = vmatprep.subr.mxu0 0.0
    %1745 = vmatpush1.msra.mxu0 0.0
    %1746 = vmatprep.subr.mxu0 0.0
    %1747 = vmatpush1.msra.mxu0 0.0
    %1748 = vmatprep.mubr.f32.mxu0 %v1670
    %1749 = vmatmul.mubr.f32.gmra.mrb[0].mxu0 %v1285
    %v1750 = vpop.f32.mrb[0].mxu0
    %v1751 = vadd.f32 %v1667, %v1750
    %v1752 = vpop.f32.mrb[0].mxu0
    %1753 = vmatprep.mubr.f32.mxu0 %v1673
    %1754 = vmatmul.mubr.f32.gmra.mrb[0].mxu0 %v1286
    %v1755 = vpop.f32.mrb[0].mxu0
    %v1756 = vadd.f32 %v1667, %v1755
    %v1757 = vpop.f32.mrb[0].mxu0
    %1758 = vmatprep.mubr.f32.mxu0 %v1676
    %1759 = vmatmul.mubr.f32.gmra.mrb[0].mxu0 %v1635
    %v1760 = vpop.f32.mrb[0].mxu0
    %v1761 = vadd.f32 %v1667, %v1760
    %v1762 = vpop.f32.mrb[0].mxu0
    %1763 = vmatprep.mubr.f32.mxu0 %v1679
    %1764 = vmatmul.mubr.f32.gmra.mrb[0].mxu0 %v1636
    %v1765 = vpop.f32.mrb[0].mxu0
    %v1766 = vadd.f32 %v1667, %v1765
    %v1767 = vpop.f32.mrb[0].mxu0
    %1768 = vdwg.mxu0
    %v1769 = vtanh.pop %v1751
    %v1770 = vtanh.pop %v1756
    %v1771 = vtanh.pop %v1761
    %v1772 = vtanh.pop %v1766
    %1775 = vrot.lane.b32.xlu0 %v27, 32
    %v1776 = vpop.permute.xlu0 %1775
    %1777 = vrot.lane.b32.xlu0 %v28, 32
    %v1778 = vpop.permute.xlu0 %1777
    %1779 = vrot.lane.b32.xlu0 %v29, 32
    %v1780 = vpop.permute.xlu0 %1779
    %1781 = vrot.lane.b32.xlu0 %v30, 32
    %v1782 = vpop.permute.xlu0 %1781
    %v1787 = vmul.f32 %v928, %v1776
    %v1788 = vmul.f32 %v930, %v1778
    %v1789 = vmul.f32 %v932, %v1780
    %v1790 = vmul.f32 %v934, %v1782
    %v1791 = vsub.f32 1.0, %v928
    %v1792 = vsub.f32 1.0, %v930
    %v1793 = vsub.f32 1.0, %v932
    %v1794 = vsub.f32 1.0, %v934
    %1799 = vrot.lane.b32.xlu0 %v1769, 32
    %v1800 = vpop.permute.xlu0 %1799
    %1801 = vrot.lane.b32.xlu0 %v1770, 32
    %v1802 = vpop.permute.xlu0 %1801
    %1803 = vrot.lane.b32.xlu0 %v1771, 32
    %v1804 = vpop.permute.xlu0 %1803
    %1805 = vrot.lane.b32.xlu0 %v1772, 32
    %v1806 = vpop.permute.xlu0 %1805
    %v1811 = vmul.f32 %v1791, %v1800
    %v1812 = vmul.f32 %v1792, %v1802
    %v1813 = vmul.f32 %v1793, %v1804
    %v1814 = vmul.f32 %v1794, %v1806
    %v1815 = vadd.f32 %v1787, %v1811
    %v1816 = vadd.f32 %v1788, %v1812
    %v1817 = vadd.f32 %v1789, %v1813
    %v1818 = vadd.f32 %v1790, %v1814
    %1823 = vrot.lane.b32.xlu0 %v1815, 96
    %v1824 = vpop.permute.xlu0 %1823
    %1825 = vrot.lane.b32.xlu0 %v1816, 96
    %v1826 = vpop.permute.xlu0 %1825
    %1827 = vrot.lane.b32.xlu0 %v1817, 96
    %v1828 = vpop.permute.xlu0 %1827
    %1829 = vrot.lane.b32.xlu0 %v1818, 96
    %v1830 = vpop.permute.xlu0 %1829
    %vm1835 = vcmask 261120
    %1836 = vst.msk [vmem:[#allocation2] sm:$0xff] %vm1835, %v1824
    %1837 = vst.msk [vmem:[#allocation2 + $0x8] sm:$0xff] %vm1835, %v1826
    %1838 = vst.msk [vmem:[#allocation2 + $0x10] sm:$0xff] %vm1835, %v1828
    %1839 = vst.msk [vmem:[#allocation2 + $0x18] sm:$0xff] %vm1835, %v1830
    // Predicated region
    $region30: #{tpu_custom_call.1} parent=1 // pred_check
      _
    $region31: #{tpu_custom_call.1} parent=1 // pred_check_branch
      %1841 = sbr.rel (0) target = $region33
    $region32: #{tpu_custom_call.1} parent=1 // pred_region
      %s1843 = ssub.s32 512, 512
      %1844 = vsyncadd [#allocation3], %s1843
      %s1845 = sshll.u32 [#allocation2], 4
      %s1846 = int_to_ptr.vmem [resolvable:$true] %s1845
      %1851 = dma.vmem_to_hbm [thread:$0]  %s1846, 512, %s7, [#allocation3], 128, 128, 8
    $region33: #{tpu_custom_call.1} parent=1 // pred_fallthru
      _
    // Predicated region
    $region34: #{tpu_custom_call.1} parent=1 // pred_check
      _
    $region35: #{tpu_custom_call.1} parent=1 // pred_check_branch
      %1853 = sbr.rel (0) target = $region37
    $region36: #{tpu_custom_call.1} parent=1 // pred_region
      %1854 = dma.done [#allocation3], 512
    $region37: #{tpu_custom_call.1} parent=1 // pred_fallthru
      _
    %1855 = vsyncpa [#allocation3], 1

</llo_original>
